<compile_context>
chip_gen: v7x
topology: tpu7x:2x2x1
jax: 0.10.0
libtpu: 0.0.40
codegen_flags: <defaults>
</compile_context>

<pallas_src>
import jax
import jax.numpy as jnp
from jax.experimental import pallas as pl
from jax.experimental.pallas import tpu as pltpu

LANE = 128  # lane width; padded feature dims are multiples of this


def _round_up(x, m):
    return ((x + m - 1) // m) * m


def mlp_kernel(x_ref, w1_ref, b1_ref, w2_ref, b2_ref, o_ref):
    # x_ref : (tile, D_in)  f32   (bf16 cast in-kernel; VPU cast is free vs the
    #                              saved per-call pad/cast HBM pass)
    # w1_ref: (D_in, Hp)    bf16  (resident; K axis unpadded to match x)
    # b1_ref: (1, Hp)       f32
    # w2_ref: (Hp, Cp)      bf16  (resident)
    # b2_ref: (1, Cp)       f32
    # o_ref : (tile, Cp)    bf16/f32 -- lane-dense (128-wide) unmasked stores
    x = x_ref[...].astype(jnp.bfloat16)
    # First matmul on the MXU (bf16 inputs, f32 accumulation).
    h = jnp.dot(x, w1_ref[...], preferred_element_type=jnp.float32)
    # Bias + ReLU in f32 on the VPU (v5e has no bf16 VPU path).
    h = jnp.maximum(h + b1_ref[...], 0.0)
    # Second matmul: cast hidden back to bf16 only at the MXU input.
    h = h.astype(jnp.bfloat16)
    o = jnp.dot(h, w2_ref[...], preferred_element_type=jnp.float32) + b2_ref[...]
    o_ref[...] = o.astype(o_ref.dtype)


def prepare_params(w1, b1, w2, b2):
    """One-time parameter prep (do this outside the per-call path).

    PyTorch layout in:  w1 (H, D_in), b1 (H,), w2 (C, H), b2 (C,).
    Weights are pre-transposed to (in, out), cast to bf16, and zero-padded to
    128 lanes on the *output* dims only (H, C).  Zero padding is inert: zero
    W1 columns + zero b1 tail give ReLU(0)=0 hidden pads, which hit zero W2
    rows; padded logit lanes are sliced off after the kernel.
    """
    H, D_in = w1.shape
    C = w2.shape[0]
    Hp, Cp = _round_up(H, LANE), _round_up(C, LANE)

    w1_t = jnp.zeros((D_in, Hp), jnp.bfloat16).at[:, :H].set(
        w1.T.astype(jnp.bfloat16))
    b1_r = jnp.zeros((1, Hp), jnp.float32).at[0, :H].set(b1.astype(jnp.float32))
    w2_t = jnp.zeros((Hp, Cp), jnp.bfloat16).at[:H, :C].set(
        w2.T.astype(jnp.bfloat16))
    b2_r = jnp.zeros((1, Cp), jnp.float32).at[0, :C].set(b2.astype(jnp.float32))

    return {"w1": w1_t, "b1": b1_r, "w2": w2_t, "b2": b2_r,
            "d_in": D_in, "hidden": H, "num_classes": C}


def _pick_batch_tile(B):
    # Big tiles amortize per-step pipeline overhead and MXU fill/drain (M is
    # the only MXU-utilization lever here), but keep >= 2 parallel grid steps
    # when possible so both v7x TensorCores get work.
    if B <= 16:
        tile = _round_up(max(B, 8), 8)
    elif B <= 2048:
        tile = _round_up(pl.cdiv(B, 2), 8)
    else:
        tile = 1024
    return min(tile, _round_up(B, 8))


def mlp_classifier_forward(x, params, *, batch_tile=None, out_dtype=jnp.bfloat16):
    """x: (B, D_in) float; params from prepare_params. Returns (B, C) out_dtype."""
    w1_t, b1_r, w2_t, b2_r = params["w1"], params["b1"], params["w2"], params["b2"]
    D_in, C = params["d_in"], params["num_classes"]
    assert x.shape[1] == D_in

    B = x.shape[0]
    Hp = w1_t.shape[1]
    Cp = w2_t.shape[1]

    if batch_tile is None:
        batch_tile = _pick_batch_tile(B)
    batch_tile = max(8, _round_up(batch_tile, 8))
    batch_tile = min(batch_tile, _round_up(B, 8))
    grid = (pl.cdiv(B, batch_tile),)
    # If B % batch_tile != 0 the trailing rows of the last x block are
    # unspecified, but they only feed output rows that Pallas masks on store.

    out_bytes = jnp.dtype(out_dtype).itemsize

    def build_call(single_buffer_weights):
        if single_buffer_weights:
            def const_spec(shape):
                # Constant index_map -> block never changes; 1 buffer is enough.
                return pl.BlockSpec(shape, lambda i: (0, 0),
                                    pipeline_mode=pl.Buffered(1))
        else:
            def const_spec(shape):
                return pl.BlockSpec(shape, lambda i: (0, 0))

        wbuf = 1 if single_buffer_weights else 2
        est = (
            2 * batch_tile * D_in * 4                     # x tile (f32, 2 bufs)
            + wbuf * (D_in * Hp * 2 + Hp * Cp * 2)        # W1 + W2 (bf16)
            + wbuf * (8 * Hp * 4 + 8 * Cp * 4)            # biases (f32, sublane pad)
            + 2 * batch_tile * Cp * out_bytes             # out tile (2 bufs)
            + batch_tile * Hp * 6 + batch_tile * Cp * 4   # in-kernel h/o temps
        )
        vmem_limit = int(min(48 * 1024 * 1024, max(8 * 1024 * 1024, 3 * est)))

        return pl.pallas_call(
            mlp_kernel,
            out_shape=jax.ShapeDtypeStruct((B, Cp), out_dtype),
            grid=grid,
            in_specs=[
                pl.BlockSpec((batch_tile, D_in), lambda i: (i, 0)),  # x (streamed)
                const_spec((D_in, Hp)),                              # W1^T (resident)
                const_spec((1, Hp)),                                 # b1
                const_spec((Hp, Cp)),                                # W2^T (resident)
                const_spec((1, Cp)),                                 # b2
            ],
            out_specs=pl.BlockSpec((batch_tile, Cp), lambda i: (i, 0)),
            compiler_params=pltpu.CompilerParams(
                dimension_semantics=("parallel",),
                vmem_limit_bytes=vmem_limit,
            ),
        )

    try:
        out_padded = build_call(True)(x, w1_t, b1_r, w2_t, b2_r)
    except Exception:
        # pipeline_mode / Buffered(1) unsupported on this jax build: fall back
        # to default double-buffered resident weights (correctness identical).
        out_padded = build_call(False)(x, w1_t, b1_r, w2_t, b2_r)

    # Drop the zero-padded class lanes (cheap: bf16, classes only).  If the
    # consumer is softmax/argmax it could be fused into the kernel instead.
    return out_padded[:, :C]


if __name__ == "__main__":
    # Small shapes consistent with the module forward (batch, input_dim);
    # feature dims deliberately not multiples of 128 to exercise padding.
    batch, input_dim, hidden_dim, num_classes = 256, 48, 96, 10

    key = jax.random.PRNGKey(0)
    kx, kw1, kb1, kw2, kb2 = jax.random.split(key, 5)

    x = jax.random.normal(kx, (batch, input_dim), dtype=jnp.float32)
    # Deterministic synthetic parameters (PyTorch Linear shapes).
    w1 = jax.random.normal(kw1, (hidden_dim, input_dim), dtype=jnp.float32) * 0.1
    b1 = jax.random.normal(kb1, (hidden_dim,), dtype=jnp.float32) * 0.1
    w2 = jax.random.normal(kw2, (num_classes, hidden_dim), dtype=jnp.float32) * 0.1
    b2 = jax.random.normal(kb2, (num_classes,), dtype=jnp.float32) * 0.1

    params = prepare_params(w1, b1, w2, b2)

    # Default tiling: batch_tile = 128 -> grid = (2,), both steps "parallel".
    out = mlp_classifier_forward(x, params)
    out = jax.block_until_ready(out)
    assert out.shape == (batch, num_classes)
    out_f32 = out.astype(jnp.float32)

    # Quantization-matched reference (bf16 MXU inputs, f32 accumulation,
    # f32 bias/ReLU, bf16 output) -> tight tolerance.
    xb = x.astype(jnp.bfloat16).astype(jnp.float32)
    w1b = w1.astype(jnp.bfloat16).astype(jnp.float32)
    w2b = w2.astype(jnp.bfloat16).astype(jnp.float32)
    h_ref = jnp.maximum(xb @ w1b.T + b1, 0.0)
    ref_q = h_ref.astype(jnp.bfloat16).astype(jnp.float32) @ w2b.T + b2
    ref_q_b = ref_q.astype(jnp.bfloat16).astype(jnp.float32)
    assert jnp.allclose(out_f32, ref_q_b, atol=2e-2, rtol=2e-2), float(
        jnp.max(jnp.abs(out_f32 - ref_q_b)))

    # Also within bf16 tolerance of the full-f32 PyTorch-equivalent math.
    ref_f32 = jnp.maximum(x @ w1.T + b1, 0.0) @ w2.T + b2
    assert jnp.allclose(out_f32, ref_f32, atol=6e-2, rtol=6e-2), float(
        jnp.max(jnp.abs(out_f32 - ref_f32)))

    # f32-logit path (for consumers that strictly need f32 output).
    out32 = jax.block_until_ready(
        mlp_classifier_forward(x, params, out_dtype=jnp.float32))
    assert out32.shape == (batch, num_classes) and out32.dtype == jnp.float32
    assert jnp.allclose(out32, ref_q, atol=1e-2, rtol=1e-2), float(
        jnp.max(jnp.abs(out32 - ref_q)))

    print("KERNEL_OK")
</pallas_src>

<mosaic_0001>
module attributes {stable_mosaic.version = 11 : i64} {
  func.func @mlp_kernel(%arg0: i32, %arg1: memref<128x48xf32, #tpu.memory_space<vmem>>, %arg2: memref<48x128xbf16, #tpu.memory_space<vmem>>, %arg3: memref<1x128xf32, #tpu.memory_space<vmem>>, %arg4: memref<128x128xbf16, #tpu.memory_space<vmem>>, %arg5: memref<1x128xf32, #tpu.memory_space<vmem>>, %arg6: memref<128x128xbf16, #tpu.memory_space<vmem>>) attributes {dimension_semantics = [#tpu.dimension_semantics<parallel>], iteration_bounds = array<i64: 2>, scalar_prefetch = 0 : i64, scratch_operands = 0 : i64, tpu.core_type = #tpu.core_type<tc>, window_params = [{transform_indices = @transform_0, window_bounds = array<i64: 128, 48>}, {pipeline_mode = #tpu.pipeline_mode<synchronous>, transform_indices = @transform_1, window_bounds = array<i64: 48, 128>}, {pipeline_mode = #tpu.pipeline_mode<synchronous>, transform_indices = @transform_2, window_bounds = array<i64: 1, 128>}, {pipeline_mode = #tpu.pipeline_mode<synchronous>, transform_indices = @transform_3, window_bounds = array<i64: 128, 128>}, {pipeline_mode = #tpu.pipeline_mode<synchronous>, transform_indices = @transform_4, window_bounds = array<i64: 1, 128>}, {transform_indices = @transform_5, window_bounds = array<i64: 128, 128>}]} {
    %c0 = arith.constant 0 : index
    %c0_0 = arith.constant 0 : index
    %0 = vector.load %arg1[%c0, %c0_0] : memref<128x48xf32, #tpu.memory_space<vmem>>, vector<128x48xf32>
    %1 = arith.truncf %0 : vector<128x48xf32> to vector<128x48xbf16>
    %c0_1 = arith.constant 0 : index
    %c0_2 = arith.constant 0 : index
    %2 = vector.load %arg2[%c0_1, %c0_2] : memref<48x128xbf16, #tpu.memory_space<vmem>>, vector<48x128xbf16>
    %cst = arith.constant dense<0.000000e+00> : vector<128x128xf32>
    %3 = tpu.matmul %1, %2, %cst {dimension_numbers = #tpu.dot_dimension_numbers<[1], [0], [0], [1], [0, 0, 1, 1], [], []>} : vector<128x48xbf16>, vector<48x128xbf16>, vector<128x128xf32> -> vector<128x128xf32>
    %c0_3 = arith.constant 0 : index
    %c0_4 = arith.constant 0 : index
    %4 = vector.load %arg3[%c0_3, %c0_4] : memref<1x128xf32, #tpu.memory_space<vmem>>, vector<1x128xf32>
    %5 = vector.broadcast %4 : vector<1x128xf32> to vector<128x128xf32>
    %6 = arith.addf %3, %5 : vector<128x128xf32>
    %cst_5 = arith.constant 0.000000e+00 : f32
    %7 = vector.broadcast %cst_5 : f32 to vector<128x128xf32>
    %8 = arith.maximumf %6, %7 : vector<128x128xf32>
    %9 = arith.truncf %8 : vector<128x128xf32> to vector<128x128xbf16>
    %c0_6 = arith.constant 0 : index
    %c0_7 = arith.constant 0 : index
    %10 = vector.load %arg4[%c0_6, %c0_7] : memref<128x128xbf16, #tpu.memory_space<vmem>>, vector<128x128xbf16>
    %cst_8 = arith.constant dense<0.000000e+00> : vector<128x128xf32>
    %11 = tpu.matmul %9, %10, %cst_8 {dimension_numbers = #tpu.dot_dimension_numbers<[1], [0], [0], [1], [0, 0, 1, 1], [], []>} : vector<128x128xbf16>, vector<128x128xbf16>, vector<128x128xf32> -> vector<128x128xf32>
    %c0_9 = arith.constant 0 : index
    %c0_10 = arith.constant 0 : index
    %12 = vector.load %arg5[%c0_9, %c0_10] : memref<1x128xf32, #tpu.memory_space<vmem>>, vector<1x128xf32>
    %13 = vector.broadcast %12 : vector<1x128xf32> to vector<128x128xf32>
    %14 = arith.addf %11, %13 : vector<128x128xf32>
    %15 = arith.truncf %14 : vector<128x128xf32> to vector<128x128xbf16>
    %c0_11 = arith.constant 0 : index
    %c0_12 = arith.constant 0 : index
    %16 = vector.load %arg6[%c0_11, %c0_12] : memref<128x128xbf16, #tpu.memory_space<vmem>>, vector<128x128xbf16>
    tpu.vector_store %arg6[%c0_11, %c0_12], %15 {strides = array<i32>} : memref<128x128xbf16, #tpu.memory_space<vmem>>, vector<128x128xbf16>,
    return
  }
  func.func @transform_0(%arg0: i32) -> (i32, i32) {
    %c0_i32 = arith.constant 0 : i32
    %c0_i32_0 = arith.constant 0 : i32
    return %arg0, %c0_i32 : i32, i32
  }
  func.func @transform_1(%arg0: i32) -> (i32, i32) {
    %c0_i32 = arith.constant 0 : i32
    %c0_i32_0 = arith.constant 0 : i32
    %c0_i32_1 = arith.constant 0 : i32
    return %c0_i32, %c0_i32_0 : i32, i32
  }
  func.func @transform_2(%arg0: i32) -> (i32, i32) {
    %c0_i32 = arith.constant 0 : i32
    %c0_i32_0 = arith.constant 0 : i32
    %c0_i32_1 = arith.constant 0 : i32
    return %c0_i32, %c0_i32_0 : i32, i32
  }
  func.func @transform_3(%arg0: i32) -> (i32, i32) {
    %c0_i32 = arith.constant 0 : i32
    %c0_i32_0 = arith.constant 0 : i32
    %c0_i32_1 = arith.constant 0 : i32
    return %c0_i32, %c0_i32_0 : i32, i32
  }
  func.func @transform_4(%arg0: i32) -> (i32, i32) {
    %c0_i32 = arith.constant 0 : i32
    %c0_i32_0 = arith.constant 0 : i32
    %c0_i32_1 = arith.constant 0 : i32
    return %c0_i32, %c0_i32_0 : i32, i32
  }
  func.func @transform_5(%arg0: i32) -> (i32, i32) {
    %c0_i32 = arith.constant 0 : i32
    %c0_i32_0 = arith.constant 0 : i32
    return %arg0, %c0_i32 : i32, i32
  }
}

module attributes {stable_mosaic.version = 11 : i64} {
  func.func @mlp_kernel(%arg0: i32, %arg1: memref<128x48xf32, #tpu.memory_space<vmem>>, %arg2: memref<48x128xbf16, #tpu.memory_space<vmem>>, %arg3: memref<1x128xf32, #tpu.memory_space<vmem>>, %arg4: memref<128x128xbf16, #tpu.memory_space<vmem>>, %arg5: memref<1x128xf32, #tpu.memory_space<vmem>>, %arg6: memref<128x128xbf16, #tpu.memory_space<vmem>>) attributes {dimension_semantics = [#tpu.dimension_semantics<parallel>], iteration_bounds = array<i64: 2>, scalar_prefetch = 0 : i64, scratch_operands = 0 : i64, tpu.core_type = #tpu.core_type<tc>, window_params = [{transform_indices = @transform_0, window_bounds = array<i64: 128, 48>}, {pipeline_mode = #tpu.pipeline_mode<synchronous>, transform_indices = @transform_1, window_bounds = array<i64: 48, 128>}, {pipeline_mode = #tpu.pipeline_mode<synchronous>, transform_indices = @transform_2, window_bounds = array<i64: 1, 128>}, {pipeline_mode = #tpu.pipeline_mode<synchronous>, transform_indices = @transform_3, window_bounds = array<i64: 128, 128>}, {pipeline_mode = #tpu.pipeline_mode<synchronous>, transform_indices = @transform_4, window_bounds = array<i64: 1, 128>}, {transform_indices = @transform_5, window_bounds = array<i64: 128, 128>}]} {
    %c0 = arith.constant 0 : index
    %c0_0 = arith.constant 0 : index
    %0 = vector.load %arg1[%c0, %c0_0] : memref<128x48xf32, #tpu.memory_space<vmem>>, vector<128x48xf32>
    %1 = arith.truncf %0 : vector<128x48xf32> to vector<128x48xbf16>
    %c0_1 = arith.constant 0 : index
    %c0_2 = arith.constant 0 : index
    %2 = vector.load %arg2[%c0_1, %c0_2] : memref<48x128xbf16, #tpu.memory_space<vmem>>, vector<48x128xbf16>
    %cst = arith.constant dense<0.000000e+00> : vector<128x128xf32>
    %3 = tpu.matmul %1, %2, %cst {dimension_numbers = #tpu.dot_dimension_numbers<[1], [0], [0], [1], [0, 0, 1, 1], [], []>} : vector<128x48xbf16>, vector<48x128xbf16>, vector<128x128xf32> -> vector<128x128xf32>
    %c0_3 = arith.constant 0 : index
    %c0_4 = arith.constant 0 : index
    %4 = vector.load %arg3[%c0_3, %c0_4] : memref<1x128xf32, #tpu.memory_space<vmem>>, vector<1x128xf32>
    %5 = vector.broadcast %4 : vector<1x128xf32> to vector<128x128xf32>
    %6 = arith.addf %3, %5 : vector<128x128xf32>
    %cst_5 = arith.constant 0.000000e+00 : f32
    %7 = vector.broadcast %cst_5 : f32 to vector<128x128xf32>
    %8 = arith.maximumf %6, %7 : vector<128x128xf32>
    %9 = arith.truncf %8 : vector<128x128xf32> to vector<128x128xbf16>
    %c0_6 = arith.constant 0 : index
    %c0_7 = arith.constant 0 : index
    %10 = vector.load %arg4[%c0_6, %c0_7] : memref<128x128xbf16, #tpu.memory_space<vmem>>, vector<128x128xbf16>
    %cst_8 = arith.constant dense<0.000000e+00> : vector<128x128xf32>
    %11 = tpu.matmul %9, %10, %cst_8 {dimension_numbers = #tpu.dot_dimension_numbers<[1], [0], [0], [1], [0, 0, 1, 1], [], []>} : vector<128x128xbf16>, vector<128x128xbf16>, vector<128x128xf32> -> vector<128x128xf32>
    %c0_9 = arith.constant 0 : index
    %c0_10 = arith.constant 0 : index
    %12 = vector.load %arg5[%c0_9, %c0_10] : memref<1x128xf32, #tpu.memory_space<vmem>>, vector<1x128xf32>
    %13 = vector.broadcast %12 : vector<1x128xf32> to vector<128x128xf32>
    %14 = arith.addf %11, %13 : vector<128x128xf32>
    %15 = arith.truncf %14 : vector<128x128xf32> to vector<128x128xbf16>
    %c0_11 = arith.constant 0 : index
    %c0_12 = arith.constant 0 : index
    %16 = vector.load %arg6[%c0_11, %c0_12] : memref<128x128xbf16, #tpu.memory_space<vmem>>, vector<128x128xbf16>
    tpu.vector_store %arg6[%c0_11, %c0_12], %15 {strides = array<i32>} : memref<128x128xbf16, #tpu.memory_space<vmem>>, vector<128x128xbf16>,
    return
  }
  func.func @transform_0(%arg0: i32) -> (i32, i32) {
    %c0_i32 = arith.constant 0 : i32
    %c0_i32_0 = arith.constant 0 : i32
    return %arg0, %c0_i32 : i32, i32
  }
  func.func @transform_1(%arg0: i32) -> (i32, i32) {
    %c0_i32 = arith.constant 0 : i32
    %c0_i32_0 = arith.constant 0 : i32
    %c0_i32_1 = arith.constant 0 : i32
    return %c0_i32, %c0_i32_0 : i32, i32
  }
  func.func @transform_2(%arg0: i32) -> (i32, i32) {
    %c0_i32 = arith.constant 0 : i32
    %c0_i32_0 = arith.constant 0 : i32
    %c0_i32_1 = arith.constant 0 : i32
    return %c0_i32, %c0_i32_0 : i32, i32
  }
  func.func @transform_3(%arg0: i32) -> (i32, i32) {
    %c0_i32 = arith.constant 0 : i32
    %c0_i32_0 = arith.constant 0 : i32
    %c0_i32_1 = arith.constant 0 : i32
    return %c0_i32, %c0_i32_0 : i32, i32
  }
  func.func @transform_4(%arg0: i32) -> (i32, i32) {
    %c0_i32 = arith.constant 0 : i32
    %c0_i32_0 = arith.constant 0 : i32
    %c0_i32_1 = arith.constant 0 : i32
    return %c0_i32, %c0_i32_0 : i32, i32
  }
  func.func @transform_5(%arg0: i32) -> (i32, i32) {
    %c0_i32 = arith.constant 0 : i32
    %c0_i32_0 = arith.constant 0 : i32
    return %arg0, %c0_i32 : i32, i32
  }
}

</mosaic_0001>

<llo_original>
// kernel: tpu_custom_call.1
$region0: #{tpu_custom_call.1}
  #allocation0 [shape = 'u32[]', space=smem, size = 0x4, offset = 0x4, fixed_abs, tag = 'smem constant byte address 0x4 - core index']
  #allocation1 [shape = 'u32[144,128]{1,0:T(1,128)}', space=vmem, size = 0x12000, scoped, tag = 'internal scratch']
  %s0 = inlined_call_operand.vmem [shape: f32[256,48], index: 0, kind: input, shape index: {}]
  %s1 = inlined_call_operand.vmem [shape: bf16[48,128], index: 1, kind: input, shape index: {}]
  %s2 = inlined_call_operand.vmem [shape: f32[1,128], index: 2, kind: input, shape index: {}]
  %s3 = inlined_call_operand.vmem [shape: bf16[128,128], index: 3, kind: input, shape index: {}]
  %s4 = inlined_call_operand.vmem [shape: f32[1,128], index: 4, kind: input, shape index: {}]
  %s5 = inlined_call_operand.hbm [shape: bf16[256,128], index: 5, kind: output, shape index: {}]
  %s6 = sld [smem:[#allocation0]]
  $region53: #{tpu_custom_call.1} parent=0
    _
  %s8 = ssub.s32 1, %s6
  %s9 = scalar_select 0, %s8, %s6
  $region1: #{tpu_custom_call.1} parent=0
    #allocation2 [shape = 'u8[65536]{0}', space=vmem, size = 0x10000, scoped, tag = 'output window, operand 0']
    #allocation3 [shape = 's32[2]{0}', space=sflag, size = 0x8, scoped, tag = 'scoped memory for tpu_custom_call.1']
    %10 = vsyncpa [#allocation3], 0
    %s11 = scalar_lea.sflag [#allocation3], 1
    %12 = vsyncpa %s11, 0
    loop: start=0, step=1, limit=4
    $region2: #{tpu_custom_call.1} parent=1 // loop_pre_header
      _
    $region3: #{tpu_custom_call.1} parent=1 // loop_header
      %s14 = sphi 0, %s18
      %p15 = scmp.ge.s32.totalorder %s14, 4
      %s24 = sphi 0, %s26
      %s27 = sphi 0, %s24
      %s28 = sphi 0, %s27
      %s44 = sphi 0, %s28
      %s48 = sphi 0, %s48
      %s50 = sphi 0, %s48
      %s51 = sphi 0, %s50
      %s65 = sphi 0, %s51
      %s69 = sphi 0, %s69
      %s71 = sphi 0, %s69
      %s72 = sphi 0, %s71
      %s86 = sphi 0, %s72
      %s90 = sphi 0, %s90
      %s92 = sphi 0, %s90
      %s93 = sphi 0, %s92
      %s107 = sphi 0, %s93
      %s111 = sphi 0, %s111
      %s113 = sphi 0, %s111
      %s114 = sphi 0, %s113
      %s128 = sphi 0, %s114
      %s134 = sphi 0, %s136
      %s137 = sphi 0, %s134
      %s138 = sphi 0, %s137
      %s154 = sphi 0, %s138
    $region4: #{tpu_custom_call.1} parent=1 // loop_header_branch
      %17 = sbr.rel (%p15) target = $region8
    $region5: #{tpu_custom_call.1} parent=1 // loop_body
      %s19 = ssub.s32 %s14, 1
      %s20 = ssub.s32 %s14, 2
      %s21 = sadd.s32 %s14, 1
      %s22 = ssub.s32 %s14, %s21
      %p23 = scmp.eq.s32.totalorder %s22, 0
      %s25 = sadd.s32 %s24, 1
      %s26 = scalar_select %p23, %s24, %s25
      %p29 = pneg %p23
      %p30 = scmp.eq.s32.totalorder %s14, 1
      %p31 = por %p29, %p30
      %p32 = scmp.ne.s32.totalorder %s24, %s27
      %p33 = scmp.eq.s32.totalorder %s14, 0
      %p34 = por %p32, %p33
      %p35 = scmp.ne.s32.totalorder %s24, %s27
      %p36 = scmp.eq.s32.totalorder %s19, 1
      %p37 = por %p35, %p36
      %p38 = scmp.ne.s32.totalorder %s27, %s28
      %p39 = scmp.eq.s32.totalorder %s19, 0
      %p40 = por %p38, %p39
      %p41 = scmp.ne.s32.totalorder %s27, %s28
      %p42 = scmp.eq.s32.totalorder %s20, 1
      %p43 = por %p41, %p42
      %p45 = scmp.ne.s32.totalorder %s28, %s44
      %p46 = scmp.eq.s32.totalorder %s20, 0
      %p47 = por %p45, %p46
      %s49 = sadd.s32 %s48, 1
      %p52 = scmp.eq.s32.totalorder %s14, 1
      %p53 = scmp.ne.s32.totalorder %s48, %s50
      %p54 = scmp.eq.s32.totalorder %s14, 0
      %p55 = por %p53, %p54
      %p56 = scmp.ne.s32.totalorder %s48, %s50
      %p57 = scmp.eq.s32.totalorder %s19, 1
      %p58 = por %p56, %p57
      %p59 = scmp.ne.s32.totalorder %s50, %s51
      %p60 = scmp.eq.s32.totalorder %s19, 0
      %p61 = por %p59, %p60
      %p62 = scmp.ne.s32.totalorder %s50, %s51
      %p63 = scmp.eq.s32.totalorder %s20, 1
      %p64 = por %p62, %p63
      %p66 = scmp.ne.s32.totalorder %s51, %s65
      %p67 = scmp.eq.s32.totalorder %s20, 0
      %p68 = por %p66, %p67
      %s70 = sadd.s32 %s69, 1
      %p73 = scmp.eq.s32.totalorder %s14, 1
      %p74 = scmp.ne.s32.totalorder %s69, %s71
      %p75 = scmp.eq.s32.totalorder %s14, 0
      %p76 = por %p74, %p75
      %p77 = scmp.ne.s32.totalorder %s69, %s71
      %p78 = scmp.eq.s32.totalorder %s19, 1
      %p79 = por %p77, %p78
      %p80 = scmp.ne.s32.totalorder %s71, %s72
      %p81 = scmp.eq.s32.totalorder %s19, 0
      %p82 = por %p80, %p81
      %p83 = scmp.ne.s32.totalorder %s71, %s72
      %p84 = scmp.eq.s32.totalorder %s20, 1
      %p85 = por %p83, %p84
      %p87 = scmp.ne.s32.totalorder %s72, %s86
      %p88 = scmp.eq.s32.totalorder %s20, 0
      %p89 = por %p87, %p88
      %s91 = sadd.s32 %s90, 1
      %p94 = scmp.eq.s32.totalorder %s14, 1
      %p95 = scmp.ne.s32.totalorder %s90, %s92
      %p96 = scmp.eq.s32.totalorder %s14, 0
      %p97 = por %p95, %p96
      %p98 = scmp.ne.s32.totalorder %s90, %s92
      %p99 = scmp.eq.s32.totalorder %s19, 1
      %p100 = por %p98, %p99
      %p101 = scmp.ne.s32.totalorder %s92, %s93
      %p102 = scmp.eq.s32.totalorder %s19, 0
      %p103 = por %p101, %p102
      %p104 = scmp.ne.s32.totalorder %s92, %s93
      %p105 = scmp.eq.s32.totalorder %s20, 1
      %p106 = por %p104, %p105
      %p108 = scmp.ne.s32.totalorder %s93, %s107
      %p109 = scmp.eq.s32.totalorder %s20, 0
      %p110 = por %p108, %p109
      %s112 = sadd.s32 %s111, 1
      %p115 = scmp.eq.s32.totalorder %s14, 1
      %p116 = scmp.ne.s32.totalorder %s111, %s113
      %p117 = scmp.eq.s32.totalorder %s14, 0
      %p118 = por %p116, %p117
      %p119 = scmp.ne.s32.totalorder %s111, %s113
      %p120 = scmp.eq.s32.totalorder %s19, 1
      %p121 = por %p119, %p120
      %p122 = scmp.ne.s32.totalorder %s113, %s114
      %p123 = scmp.eq.s32.totalorder %s19, 0
      %p124 = por %p122, %p123
      %p125 = scmp.ne.s32.totalorder %s113, %s114
      %p126 = scmp.eq.s32.totalorder %s20, 1
      %p127 = por %p125, %p126
      %p129 = scmp.ne.s32.totalorder %s114, %s128
      %p130 = scmp.eq.s32.totalorder %s20, 0
      %p131 = por %p129, %p130
      %s132 = ssub.s32 %s14, %s21
      %p133 = scmp.eq.s32.totalorder %s132, 0
      %s135 = sadd.s32 %s134, 1
      %s136 = scalar_select %p133, %s134, %s135
      %p139 = pneg %p133
      %p140 = scmp.eq.s32.totalorder %s14, 1
      %p141 = por %p139, %p140
      %p142 = scmp.ne.s32.totalorder %s134, %s137
      %p143 = scmp.eq.s32.totalorder %s14, 0
      %p144 = por %p142, %p143
      %p145 = scmp.ne.s32.totalorder %s134, %s137
      %p146 = scmp.eq.s32.totalorder %s19, 1
      %p147 = por %p145, %p146
      %p148 = scmp.ne.s32.totalorder %s137, %s138
      %p149 = scmp.eq.s32.totalorder %s19, 0
      %p150 = por %p148, %p149
      %p151 = scmp.ne.s32.totalorder %s137, %s138
      %p152 = scmp.eq.s32.totalorder %s20, 1
      %p153 = por %p151, %p152
      %p155 = scmp.ne.s32.totalorder %s138, %s154
      %p156 = scmp.eq.s32.totalorder %s20, 0
      %p157 = por %p155, %p156
      %p158 = scmp.le.s32.totalorder 1, %s14
      %p159 = scmp.lt.s32.totalorder %s14, 3
      %p160 = pnand %p158, %p159
      %p161 = pneg %p160
      // Predicated region
      $region9: #{tpu_custom_call.1} parent=5 // pred_check
        _
      $region10: #{tpu_custom_call.1} parent=5 // pred_check_branch
        %163 = sbr.rel (%p160) target = $region12
      $region11: #{tpu_custom_call.1} parent=5 // pred_region
        %s164 = ssub.s32 %s14, 1
        // Predicated region
        $region13: #{tpu_custom_call.1} parent=11 // pred_check
          %p165 = pneg %p61
        $region14: #{tpu_custom_call.1} parent=11 // pred_check_branch
          %167 = sbr.rel (%p165) target = $region16
        $region15: #{tpu_custom_call.1} parent=11 // pred_region
          _
        $region16: #{tpu_custom_call.1} parent=11 // pred_fallthru
          _
        // Predicated region
        $region17: #{tpu_custom_call.1} parent=11 // pred_check
          %p168 = pneg %p82
        $region18: #{tpu_custom_call.1} parent=11 // pred_check_branch
          %170 = sbr.rel (%p168) target = $region20
        $region19: #{tpu_custom_call.1} parent=11 // pred_region
          _
        $region20: #{tpu_custom_call.1} parent=11 // pred_fallthru
          _
        // Predicated region
        $region21: #{tpu_custom_call.1} parent=11 // pred_check
          %p171 = pneg %p103
        $region22: #{tpu_custom_call.1} parent=11 // pred_check_branch
          %173 = sbr.rel (%p171) target = $region24
        $region23: #{tpu_custom_call.1} parent=11 // pred_region
          _
        $region24: #{tpu_custom_call.1} parent=11 // pred_fallthru
          _
        // Predicated region
        $region25: #{tpu_custom_call.1} parent=11 // pred_check
          %p174 = pneg %p124
        $region26: #{tpu_custom_call.1} parent=11 // pred_check_branch
          %176 = sbr.rel (%p174) target = $region28
        $region27: #{tpu_custom_call.1} parent=11 // pred_region
          _
        $region28: #{tpu_custom_call.1} parent=11 // pred_fallthru
          _
      $region12: #{tpu_custom_call.1} parent=5 // pred_fallthru
        _
      %p177 = scmp.lt.s32.totalorder %s14, 2
      // Predicated region
      $region29: #{tpu_custom_call.1} parent=5 // pred_check
        %p178 = pneg %p177
      $region30: #{tpu_custom_call.1} parent=5 // pred_check_branch
        %180 = sbr.rel (%p178) target = $region32
      $region31: #{tpu_custom_call.1} parent=5 // pred_region
        // Predicated region
        $region33: #{tpu_custom_call.1} parent=31 // pred_check
          %p181 = pneg %p34
        $region34: #{tpu_custom_call.1} parent=31 // pred_check_branch
          %183 = sbr.rel (%p181) target = $region36
        $region35: #{tpu_custom_call.1} parent=31 // pred_region
          %s184 = smul.u32 16, %s14
          %p185 = scmp.lt.s32.totalorder %s184, 31
          %s186 = scalar_select %p185, %s184, 31
          %s187 = smul.addr %s186, 8
          %s188 = scalar_lea.vmem %s0, %s187
          %s189 = smul.u32 16, %s14
        $region36: #{tpu_custom_call.1} parent=31 // pred_fallthru
          _
      $region32: #{tpu_custom_call.1} parent=5 // pred_fallthru
        _
      %p190 = scmp.le.s32.totalorder 1, %s14
      %p191 = scmp.lt.s32.totalorder %s14, 3
      %p192 = pnand %p190, %p191
      %p193 = pneg %p192
      // Predicated region
      $region37: #{tpu_custom_call.1} parent=5 // pred_check
        _
      $region38: #{tpu_custom_call.1} parent=5 // pred_check_branch
        %195 = sbr.rel (%p192) target = $region40
      $region39: #{tpu_custom_call.1} parent=5 // pred_region
        %s196 = ssub.s32 %s14, 1
        %s197 = smul.u32 16, %s19
        %p198 = scmp.lt.s32.totalorder %s197, 31
        %s199 = scalar_select %p198, %s197, 31
        %s200 = smul.addr %s199, 8
        %s201 = scalar_lea.vmem %s0, %s200
        %p202 = pneg %p40
        %p203 = pneg %p37
        %p204 = pneg %p61
        %p205 = pneg %p58
        %p206 = pneg %p82
        %p207 = pneg %p79
        %p208 = pneg %p103
        %p209 = pneg %p100
        %p210 = pneg %p124
        %p211 = pneg %p121
        %p212 = pneg %p150
        %p213 = pneg %p147
        %s214 = sand.u32 %s137, 1
        %s215 = scalar_lea.sflag [#allocation3], %s214
        %s216 = sand.u32 %s137, 1
        %s217 = smul.addr %s216, 64
        %s218 = scalar_lea.vmem [#allocation2], %s217
        %s219 = smul.u32 16, %s19
        %p220 = scmp.lt.s32.totalorder %s219, 31
        %s221 = scalar_select %p220, %s219, 31
        %s222 = smul.addr %s221, 8
        %s223 = scalar_lea.vmem %s0, %s222
        %s224 = smul.u32 16, %s19
        %s225 = smul.u32 16, %s19
        %v227 = vld [vmem:[%s223] sm:$0xff]
        %v228 = vld [vmem:[%s223 + $0x8] sm:$0xff]
        %v229 = vld [vmem:[%s223 + $0x10] sm:$0xff]
        %v230 = vld [vmem:[%s223 + $0x18] sm:$0xff]
        %v231 = vld [vmem:[%s223 + $0x20] sm:$0xff]
        %v232 = vld [vmem:[%s223 + $0x28] sm:$0xff]
        %v233 = vld [vmem:[%s223 + $0x30] sm:$0xff]
        %v234 = vld [vmem:[%s223 + $0x38] sm:$0xff]
        %v235 = vld [vmem:[%s223 + $0x40] sm:$0xff]
        %v236 = vld [vmem:[%s223 + $0x48] sm:$0xff]
        %v237 = vld [vmem:[%s223 + $0x50] sm:$0xff]
        %v238 = vld [vmem:[%s223 + $0x58] sm:$0xff]
        %v239 = vld [vmem:[%s223 + $0x60] sm:$0xff]
        %v240 = vld [vmem:[%s223 + $0x68] sm:$0xff]
        %v241 = vld [vmem:[%s223 + $0x70] sm:$0xff]
        %v242 = vld [vmem:[%s223 + $0x78] sm:$0xff]
        %v243 = vpack.c.bf16 %v228, %v227
        %v244 = vpack.c.bf16 %v230, %v229
        %v245 = vpack.c.bf16 %v232, %v231
        %v246 = vpack.c.bf16 %v234, %v233
        %v247 = vpack.c.bf16 %v236, %v235
        %v248 = vpack.c.bf16 %v238, %v237
        %v249 = vpack.c.bf16 %v240, %v239
        %v250 = vpack.c.bf16 %v242, %v241
        %v251 = vld [vmem:[%s1] sm:$0xf]
        %v252 = vld [vmem:[%s1 + $0x4] sm:$0xf]
        %v253 = vld [vmem:[%s1 + $0x8] sm:$0xf]
        %v254 = vld [vmem:[%s1 + $0xc] sm:$0xf]
        %v255 = vld [vmem:[%s1 + $0x10] sm:$0xf]
        %v256 = vld [vmem:[%s1 + $0x14] sm:$0xf]
        %v257 = vld [vmem:[%s2] sm:$0x1]
        %v259 = vlaneseq
        %v260 = vshrl.u32 %v259, 7
        %v261 = vsub.s32 0, %v260
        %v262 = vrot.slane %v257, %v261
        %v270 = vunpack.c.l.b16 %v251
        %v271 = vunpack.c.l.b16 %v252
        %v272 = vunpack.c.l.b16 %v253
        %v273 = vunpack.c.l.b16 %v254
        %v274 = vunpack.c.l.b16 %v255
        %v275 = vunpack.c.l.b16 %v256
        %v276 = vpack.c.b16 %v271, %v270
        %v277 = vpack.c.b16 %v273, %v272
        %v278 = vpack.c.b16 %v275, %v274
        %vm282 = vcmask 392192
        %v284 = vsel %vm282, %v243, 0
        %v287 = vsel %vm282, %v244, 0
        %v290 = vsel %vm282, %v245, 0
        %v293 = vsel %vm282, %v246, 0
        %v296 = vsel %vm282, %v247, 0
        %v299 = vsel %vm282, %v248, 0
        %v302 = vsel %vm282, %v249, 0
        %v305 = vsel %vm282, %v250, 0
        %307 = vmatprep.subr.bf16.mxu0 0
        %308 = vmatpush1.bf16.msra.mxu0 %v276
        %309 = vmatprep.subr.bf16.mxu0 0
        %310 = vmatpush1.bf16.msra.mxu0 %v277
        %311 = vmatprep.subr.bf16.mxu0 0
        %312 = vmatpush1.bf16.msra.mxu0 %v278
        %313 = vmatprep.subr.bf16.mxu0 0
        %314 = vmatpush1.bf16.msra.mxu0 0
        %315 = vmatprep.subr.bf16.mxu0 0
        %316 = vmatpush1.bf16.msra.mxu0 0
        %317 = vmatprep.subr.bf16.mxu0 0
        %318 = vmatpush1.bf16.msra.mxu0 0
        %319 = vmatprep.subr.bf16.mxu0 0
        %320 = vmatpush1.bf16.msra.mxu0 0
        %321 = vmatprep.subr.bf16.mxu0 0
        %322 = vmatpush1.bf16.msra.mxu0 0
        %323 = vmatprep.subr.bf16.mxu0 0
        %324 = vmatpush1.bf16.msra.mxu0 0
        %325 = vmatprep.subr.bf16.mxu0 0
        %326 = vmatpush1.bf16.msra.mxu0 0
        %327 = vmatprep.subr.bf16.mxu0 0
        %328 = vmatpush1.bf16.msra.mxu0 0
        %329 = vmatprep.subr.bf16.mxu0 0
        %330 = vmatpush1.bf16.msra.mxu0 0
        %331 = vmatprep.subr.bf16.mxu0 0
        %332 = vmatpush1.bf16.msra.mxu0 0
        %333 = vmatprep.subr.bf16.mxu0 0
        %334 = vmatpush1.bf16.msra.mxu0 0
        %335 = vmatprep.subr.bf16.mxu0 0
        %336 = vmatpush1.bf16.msra.mxu0 0
        %337 = vmatprep.subr.bf16.mxu0 0
        %338 = vmatpush1.bf16.msra.mxu0 0
        %339 = vmatprep.mubr.bf16.mxu0 0
        %340 = vmatmul.mubr.bf16.gmra.mrb[0].mxu0 %v284
        %v341 = vpop.f32.mrb[0].mxu0
        %v342 = vadd.f32 %v262, %v341
        %v343 = vpop.f32.mrb[0].mxu0
        %v344 = vpop.f32.mrb[0].mxu0
        %v345 = vadd.f32 %v262, %v344
        %v346 = vpop.f32.mrb[0].mxu0
        %347 = vmatprep.mubr.bf16.mxu0 0
        %348 = vmatmul.mubr.bf16.gmra.mrb[0].mxu0 %v287
        %v349 = vpop.f32.mrb[0].mxu0
        %v350 = vadd.f32 %v262, %v349
        %v351 = vpop.f32.mrb[0].mxu0
        %v352 = vpop.f32.mrb[0].mxu0
        %v353 = vadd.f32 %v262, %v352
        %v354 = vpop.f32.mrb[0].mxu0
        %355 = vmatprep.mubr.bf16.mxu0 0
        %356 = vmatmul.mubr.bf16.gmra.mrb[0].mxu0 %v290
        %v357 = vpop.f32.mrb[0].mxu0
        %v358 = vadd.f32 %v262, %v357
        %v359 = vpop.f32.mrb[0].mxu0
        %v360 = vpop.f32.mrb[0].mxu0
        %v361 = vadd.f32 %v262, %v360
        %v362 = vpop.f32.mrb[0].mxu0
        %363 = vmatprep.mubr.bf16.mxu0 0
        %364 = vmatmul.mubr.bf16.gmra.mrb[0].mxu0 %v293
        %v365 = vpop.f32.mrb[0].mxu0
        %v366 = vadd.f32 %v262, %v365
        %v367 = vpop.f32.mrb[0].mxu0
        %v368 = vpop.f32.mrb[0].mxu0
        %v369 = vadd.f32 %v262, %v368
        %v370 = vpop.f32.mrb[0].mxu0
        %371 = vmatprep.mubr.bf16.mxu0 0
        %372 = vmatmul.mubr.bf16.gmra.mrb[0].mxu0 %v296
        %v373 = vpop.f32.mrb[0].mxu0
        %v374 = vadd.f32 %v262, %v373
        %v375 = vpop.f32.mrb[0].mxu0
        %v376 = vpop.f32.mrb[0].mxu0
        %v377 = vadd.f32 %v262, %v376
        %v378 = vpop.f32.mrb[0].mxu0
        %379 = vmatprep.mubr.bf16.mxu0 0
        %380 = vmatmul.mubr.bf16.gmra.mrb[0].mxu0 %v299
        %v381 = vpop.f32.mrb[0].mxu0
        %v382 = vadd.f32 %v262, %v381
        %v383 = vpop.f32.mrb[0].mxu0
        %v384 = vpop.f32.mrb[0].mxu0
        %v385 = vadd.f32 %v262, %v384
        %v386 = vpop.f32.mrb[0].mxu0
        %387 = vmatprep.mubr.bf16.mxu0 0
        %388 = vmatmul.mubr.bf16.gmra.mrb[0].mxu0 %v302
        %v389 = vpop.f32.mrb[0].mxu0
        %v390 = vadd.f32 %v262, %v389
        %v391 = vpop.f32.mrb[0].mxu0
        %v392 = vpop.f32.mrb[0].mxu0
        %v393 = vadd.f32 %v262, %v392
        %v394 = vpop.f32.mrb[0].mxu0
        %395 = vmatprep.mubr.bf16.mxu0 0
        %396 = vmatmul.mubr.bf16.gmra.mrb[0].mxu0 %v305
        %v397 = vpop.f32.mrb[0].mxu0
        %v398 = vadd.f32 %v262, %v397
        %v399 = vpop.f32.mrb[0].mxu0
        %v400 = vpop.f32.mrb[0].mxu0
        %v401 = vadd.f32 %v262, %v400
        %v402 = vpop.f32.mrb[0].mxu0
        %403 = vdwg.mxu0
        %v404 = vmax.f32 %v342, 0.0
        %v405 = vmax.f32 %v345, 0.0
        %v406 = vmax.f32 %v350, 0.0
        %v407 = vmax.f32 %v353, 0.0
        %v408 = vmax.f32 %v358, 0.0
        %v409 = vmax.f32 %v361, 0.0
        %v410 = vmax.f32 %v366, 0.0
        %v411 = vmax.f32 %v369, 0.0
        %v412 = vmax.f32 %v374, 0.0
        %v413 = vmax.f32 %v377, 0.0
        %v414 = vmax.f32 %v382, 0.0
        %v415 = vmax.f32 %v385, 0.0
        %v416 = vmax.f32 %v390, 0.0
        %v417 = vmax.f32 %v393, 0.0
        %v418 = vmax.f32 %v398, 0.0
        %v419 = vmax.f32 %v401, 0.0
        %v420 = vpack.c.bf16 %v405, %v404
        %v421 = vpack.c.bf16 %v407, %v406
        %v422 = vpack.c.bf16 %v409, %v408
        %v423 = vpack.c.bf16 %v411, %v410
        %v424 = vpack.c.bf16 %v413, %v412
        %v425 = vpack.c.bf16 %v415, %v414
        %v426 = vpack.c.bf16 %v417, %v416
        %v427 = vpack.c.bf16 %v419, %v418
        %v428 = vld [vmem:[%s3] sm:$0xf]
        %v429 = vld [vmem:[%s3 + $0x4] sm:$0xf]
        %v430 = vld [vmem:[%s3 + $0x8] sm:$0xf]
        %v431 = vld [vmem:[%s3 + $0xc] sm:$0xf]
        %v432 = vld [vmem:[%s3 + $0x10] sm:$0xf]
        %v433 = vld [vmem:[%s3 + $0x14] sm:$0xf]
        %v434 = vld [vmem:[%s3 + $0x18] sm:$0xf]
        %v435 = vld [vmem:[%s3 + $0x1c] sm:$0xf]
        %v436 = vld [vmem:[%s3 + $0x20] sm:$0xf]
        %v437 = vld [vmem:[%s3 + $0x24] sm:$0xf]
        %v438 = vld [vmem:[%s3 + $0x28] sm:$0xf]
        %v439 = vld [vmem:[%s3 + $0x2c] sm:$0xf]
        %v440 = vld [vmem:[%s3 + $0x30] sm:$0xf]
        %v441 = vld [vmem:[%s3 + $0x34] sm:$0xf]
        %v442 = vld [vmem:[%s3 + $0x38] sm:$0xf]
        %v443 = vld [vmem:[%s3 + $0x3c] sm:$0xf]
        %v444 = vld [vmem:[%s4] sm:$0x1]
        %v446 = vlaneseq
        %v447 = vshrl.u32 %v446, 7
        %v448 = vsub.s32 0, %v447
        %v449 = vrot.slane %v444, %v448
        %v467 = vunpack.c.l.b16 %v428
        %v468 = vunpack.c.l.b16 %v429
        %v469 = vunpack.c.l.b16 %v430
        %v470 = vunpack.c.l.b16 %v431
        %v471 = vunpack.c.l.b16 %v432
        %v472 = vunpack.c.l.b16 %v433
        %v473 = vunpack.c.l.b16 %v434
        %v474 = vunpack.c.l.b16 %v435
        %v475 = vunpack.c.l.b16 %v436
        %v476 = vunpack.c.l.b16 %v437
        %v477 = vunpack.c.l.b16 %v438
        %v478 = vunpack.c.l.b16 %v439
        %v479 = vunpack.c.l.b16 %v440
        %v480 = vunpack.c.l.b16 %v441
        %v481 = vunpack.c.l.b16 %v442
        %v482 = vunpack.c.l.b16 %v443
        %v483 = vpack.c.b16 %v468, %v467
        %v484 = vpack.c.b16 %v470, %v469
        %v485 = vpack.c.b16 %v472, %v471
        %v486 = vpack.c.b16 %v474, %v473
        %v487 = vpack.c.b16 %v476, %v475
        %v488 = vpack.c.b16 %v478, %v477
        %v489 = vpack.c.b16 %v480, %v479
        %v490 = vpack.c.b16 %v482, %v481
        %499 = vmatprep.subr.bf16.mxu0 0
        %500 = vmatpush1.bf16.msra.mxu0 %v483
        %501 = vmatprep.subr.bf16.mxu0 0
        %502 = vmatpush1.bf16.msra.mxu0 %v484
        %503 = vmatprep.subr.bf16.mxu0 0
        %504 = vmatpush1.bf16.msra.mxu0 %v485
        %505 = vmatprep.subr.bf16.mxu0 0
        %506 = vmatpush1.bf16.msra.mxu0 %v486
        %507 = vmatprep.subr.bf16.mxu0 0
        %508 = vmatpush1.bf16.msra.mxu0 %v487
        %509 = vmatprep.subr.bf16.mxu0 0
        %510 = vmatpush1.bf16.msra.mxu0 %v488
        %511 = vmatprep.subr.bf16.mxu0 0
        %512 = vmatpush1.bf16.msra.mxu0 %v489
        %513 = vmatprep.subr.bf16.mxu0 0
        %514 = vmatpush1.bf16.msra.mxu0 %v490
        %515 = vmatprep.subr.bf16.mxu0 0
        %516 = vmatpush1.bf16.msra.mxu0 0
        %517 = vmatprep.subr.bf16.mxu0 0
        %518 = vmatpush1.bf16.msra.mxu0 0
        %519 = vmatprep.subr.bf16.mxu0 0
        %520 = vmatpush1.bf16.msra.mxu0 0
        %521 = vmatprep.subr.bf16.mxu0 0
        %522 = vmatpush1.bf16.msra.mxu0 0
        %523 = vmatprep.subr.bf16.mxu0 0
        %524 = vmatpush1.bf16.msra.mxu0 0
        %525 = vmatprep.subr.bf16.mxu0 0
        %526 = vmatpush1.bf16.msra.mxu0 0
        %527 = vmatprep.subr.bf16.mxu0 0
        %528 = vmatpush1.bf16.msra.mxu0 0
        %529 = vmatprep.subr.bf16.mxu0 0
        %530 = vmatpush1.bf16.msra.mxu0 0
        %531 = vmatprep.mubr.bf16.mxu0 0
        %532 = vmatmul.mubr.bf16.gmra.mrb[0].mxu0 %v420
        %v533 = vpop.f32.mrb[0].mxu0
        %v534 = vadd.f32 %v449, %v533
        %v535 = vpop.f32.mrb[0].mxu0
        %v536 = vpop.f32.mrb[0].mxu0
        %v537 = vadd.f32 %v449, %v536
        %v538 = vpop.f32.mrb[0].mxu0
        %539 = vmatprep.mubr.bf16.mxu0 0
        %540 = vmatmul.mubr.bf16.gmra.mrb[0].mxu0 %v421
        %v541 = vpop.f32.mrb[0].mxu0
        %v542 = vadd.f32 %v449, %v541
        %v543 = vpop.f32.mrb[0].mxu0
        %v544 = vpop.f32.mrb[0].mxu0
        %v545 = vadd.f32 %v449, %v544
        %v546 = vpop.f32.mrb[0].mxu0
        %547 = vmatprep.mubr.bf16.mxu0 0
        %548 = vmatmul.mubr.bf16.gmra.mrb[0].mxu0 %v422
        %v549 = vpop.f32.mrb[0].mxu0
        %v550 = vadd.f32 %v449, %v549
        %v551 = vpop.f32.mrb[0].mxu0
        %v552 = vpop.f32.mrb[0].mxu0
        %v553 = vadd.f32 %v449, %v552
        %v554 = vpop.f32.mrb[0].mxu0
        %555 = vmatprep.mubr.bf16.mxu0 0
        %556 = vmatmul.mubr.bf16.gmra.mrb[0].mxu0 %v423
        %v557 = vpop.f32.mrb[0].mxu0
        %v558 = vadd.f32 %v449, %v557
        %v559 = vpop.f32.mrb[0].mxu0
        %v560 = vpop.f32.mrb[0].mxu0
        %v561 = vadd.f32 %v449, %v560
        %v562 = vpop.f32.mrb[0].mxu0
        %563 = vmatprep.mubr.bf16.mxu0 0
        %564 = vmatmul.mubr.bf16.gmra.mrb[0].mxu0 %v424
        %v565 = vpop.f32.mrb[0].mxu0
        %v566 = vadd.f32 %v449, %v565
        %v567 = vpop.f32.mrb[0].mxu0
        %v568 = vpop.f32.mrb[0].mxu0
        %v569 = vadd.f32 %v449, %v568
        %v570 = vpop.f32.mrb[0].mxu0
        %571 = vmatprep.mubr.bf16.mxu0 0
        %572 = vmatmul.mubr.bf16.gmra.mrb[0].mxu0 %v425
        %v573 = vpop.f32.mrb[0].mxu0
        %v574 = vadd.f32 %v449, %v573
        %v575 = vpop.f32.mrb[0].mxu0
        %v576 = vpop.f32.mrb[0].mxu0
        %v577 = vadd.f32 %v449, %v576
        %v578 = vpop.f32.mrb[0].mxu0
        %579 = vmatprep.mubr.bf16.mxu0 0
        %580 = vmatmul.mubr.bf16.gmra.mrb[0].mxu0 %v426
        %v581 = vpop.f32.mrb[0].mxu0
        %v582 = vadd.f32 %v449, %v581
        %v583 = vpop.f32.mrb[0].mxu0
        %v584 = vpop.f32.mrb[0].mxu0
        %v585 = vadd.f32 %v449, %v584
        %v586 = vpop.f32.mrb[0].mxu0
        %587 = vmatprep.mubr.bf16.mxu0 0
        %588 = vmatmul.mubr.bf16.gmra.mrb[0].mxu0 %v427
        %v589 = vpop.f32.mrb[0].mxu0
        %v590 = vadd.f32 %v449, %v589
        %v591 = vpop.f32.mrb[0].mxu0
        %v592 = vpop.f32.mrb[0].mxu0
        %v593 = vadd.f32 %v449, %v592
        %v594 = vpop.f32.mrb[0].mxu0
        %595 = vdwg.mxu0
        %v596 = vpack.c.bf16 %v537, %v534
        %v597 = vpack.c.bf16 %v545, %v542
        %v598 = vpack.c.bf16 %v553, %v550
        %v599 = vpack.c.bf16 %v561, %v558
        %v600 = vpack.c.bf16 %v569, %v566
        %v601 = vpack.c.bf16 %v577, %v574
        %v602 = vpack.c.bf16 %v585, %v582
        %v603 = vpack.c.bf16 %v593, %v590
        %v612 = vunpack.c.l.b16 %v596
        %v613 = vunpack.c.h.b16 %v596
        %v614 = vunpack.c.l.b16 %v597
        %v615 = vunpack.c.h.b16 %v597
        %v616 = vunpack.c.l.b16 %v598
        %v617 = vunpack.c.h.b16 %v598
        %v618 = vunpack.c.l.b16 %v599
        %v619 = vunpack.c.h.b16 %v599
        %v620 = vunpack.c.l.b16 %v600
        %v621 = vunpack.c.h.b16 %v600
        %v622 = vunpack.c.l.b16 %v601
        %v623 = vunpack.c.h.b16 %v601
        %v624 = vunpack.c.l.b16 %v602
        %v625 = vunpack.c.h.b16 %v602
        %v626 = vunpack.c.l.b16 %v603
        %v627 = vunpack.c.h.b16 %v603
        %v628 = vpack.c.b16 %v612, %v612
        %v629 = vpack.c.b16 %v613, %v613
        %v630 = vpack.c.b16 %v614, %v614
        %v631 = vpack.c.b16 %v615, %v615
        %v632 = vpack.c.b16 %v616, %v616
        %v633 = vpack.c.b16 %v617, %v617
        %v634 = vpack.c.b16 %v618, %v618
        %v635 = vpack.c.b16 %v619, %v619
        %v636 = vpack.c.b16 %v620, %v620
        %v637 = vpack.c.b16 %v621, %v621
        %v638 = vpack.c.b16 %v622, %v622
        %v639 = vpack.c.b16 %v623, %v623
        %v640 = vpack.c.b16 %v624, %v624
        %v641 = vpack.c.b16 %v625, %v625
        %v642 = vpack.c.b16 %v626, %v626
        %v643 = vpack.c.b16 %v627, %v627
        %660 = vst [vmem:[%s218] sm:$0xf] %v628
        %661 = vst [vmem:[%s218 + $0x4] sm:$0xf] %v629
        %662 = vst [vmem:[%s218 + $0x8] sm:$0xf] %v630
        %663 = vst [vmem:[%s218 + $0xc] sm:$0xf] %v631
        %664 = vst [vmem:[%s218 + $0x10] sm:$0xf] %v632
        %665 = vst [vmem:[%s218 + $0x14] sm:$0xf] %v633
        %666 = vst [vmem:[%s218 + $0x18] sm:$0xf] %v634
        %667 = vst [vmem:[%s218 + $0x1c] sm:$0xf] %v635
        %668 = vst [vmem:[%s218 + $0x20] sm:$0xf] %v636
        %669 = vst [vmem:[%s218 + $0x24] sm:$0xf] %v637
        %670 = vst [vmem:[%s218 + $0x28] sm:$0xf] %v638
        %671 = vst [vmem:[%s218 + $0x2c] sm:$0xf] %v639
        %672 = vst [vmem:[%s218 + $0x30] sm:$0xf] %v640
        %673 = vst [vmem:[%s218 + $0x34] sm:$0xf] %v641
        %674 = vst [vmem:[%s218 + $0x38] sm:$0xf] %v642
        %675 = vst [vmem:[%s218 + $0x3c] sm:$0xf] %v643
        %s676 = sand.u32 %s137, 1
        %s677 = scalar_lea.sflag [#allocation3], %s676
        %s678 = sand.u32 %s137, 1
        %s679 = smul.addr %s678, 64
        %s680 = scalar_lea.vmem [#allocation2], %s679
        // Predicated region
        $region41: #{tpu_custom_call.1} parent=39 // pred_check
          %p681 = pneg %p147
        $region42: #{tpu_custom_call.1} parent=39 // pred_check_branch
          %683 = sbr.rel (%p681) target = $region44
        $region43: #{tpu_custom_call.1} parent=39 // pred_region
          %s684 = smul.u32 16, %s19
          %s686 = ssub.s32 1024, 1024
          %687 = vsyncadd %s677, %s686
          %s688 = smul.addr %s684, 64
          %s689 = scalar_lea.hbm %s5, %s688
          %s690 = sshll.u32 %s680, 4
          %s691 = int_to_ptr.vmem [resolvable:$true] %s690
          %696 = dma.vmem_to_hbm [thread:$0]  %s691, 1024, %s689, %s677, 64, 64, 4
        $region44: #{tpu_custom_call.1} parent=39 // pred_fallthru
          _
      $region40: #{tpu_custom_call.1} parent=5 // pred_fallthru
        _
      %p697 = scmp.le.s32.totalorder 2, %s14
      // Predicated region
      $region45: #{tpu_custom_call.1} parent=5 // pred_check
        %p698 = pneg %p697
      $region46: #{tpu_custom_call.1} parent=5 // pred_check_branch
        %700 = sbr.rel (%p698) target = $region48
      $region47: #{tpu_custom_call.1} parent=5 // pred_region
        %s701 = ssub.s32 %s14, 2
        // Predicated region
        $region49: #{tpu_custom_call.1} parent=47 // pred_check
          %p702 = pneg %p153
        $region50: #{tpu_custom_call.1} parent=47 // pred_check_branch
          %704 = sbr.rel (%p702) target = $region52
        $region51: #{tpu_custom_call.1} parent=47 // pred_region
          %s705 = sand.u32 %s138, 1
          %s706 = scalar_lea.sflag [#allocation3], %s705
          %s707 = sand.u32 %s138, 1
          %s708 = smul.addr %s707, 64
          %s709 = scalar_lea.vmem [#allocation2], %s708
          %710 = dma.done %s706, 1024
        $region52: #{tpu_custom_call.1} parent=47 // pred_fallthru
          _
      $region48: #{tpu_custom_call.1} parent=5 // pred_fallthru
        _
    $region6: #{tpu_custom_call.1} parent=1 // loop_footer
      %s18 = sadd.s32 1, %s14
    $region7: #{tpu_custom_call.1} parent=1 // loop_footer_branch
      %13 = sbr.rel target = $region3
    $region8: #{tpu_custom_call.1} parent=1 // loop_exit
      _
    %711 = vsyncpa [#allocation3], 1
    %s712 = scalar_lea.sflag [#allocation3], 1
    %713 = vsyncpa %s712, 1

// kernel: tpu_custom_call.1
$region0: #{tpu_custom_call.1}
  #allocation0 [shape = 'u32[]', space=smem, size = 0x4, offset = 0x4, fixed_abs, tag = 'smem constant byte address 0x4 - core index']
  #allocation1 [shape = 'u32[144,128]{1,0:T(1,128)}', space=vmem, size = 0x12000, scoped, tag = 'internal scratch']
  %s0 = inlined_call_operand.vmem [shape: f32[256,48], index: 0, kind: input, shape index: {}]
  %s1 = inlined_call_operand.vmem [shape: bf16[48,128], index: 1, kind: input, shape index: {}]
  %s2 = inlined_call_operand.vmem [shape: f32[1,128], index: 2, kind: input, shape index: {}]
  %s3 = inlined_call_operand.vmem [shape: bf16[128,128], index: 3, kind: input, shape index: {}]
  %s4 = inlined_call_operand.vmem [shape: f32[1,128], index: 4, kind: input, shape index: {}]
  %s5 = inlined_call_operand.hbm [shape: bf16[256,128], index: 5, kind: output, shape index: {}]
  %s6 = sld [smem:[#allocation0]]
  $region53: #{tpu_custom_call.1} parent=0
    _
  %s8 = ssub.s32 1, %s6
  %s9 = scalar_select 0, %s8, %s6
  $region1: #{tpu_custom_call.1} parent=0
    #allocation2 [shape = 'u8[65536]{0}', space=vmem, size = 0x10000, scoped, tag = 'output window, operand 0']
    #allocation3 [shape = 's32[2]{0}', space=sflag, size = 0x8, scoped, tag = 'scoped memory for tpu_custom_call.1']
    %10 = vsyncpa [#allocation3], 0
    %s11 = scalar_lea.sflag [#allocation3], 1
    %12 = vsyncpa %s11, 0
    loop: start=0, step=1, limit=4
    $region2: #{tpu_custom_call.1} parent=1 // loop_pre_header
      _
    $region3: #{tpu_custom_call.1} parent=1 // loop_header
      %s14 = sphi 0, %s18
      %p15 = scmp.ge.s32.totalorder %s14, 4
      %s24 = sphi 0, %s26
      %s27 = sphi 0, %s24
      %s28 = sphi 0, %s27
      %s44 = sphi 0, %s28
      %s48 = sphi 0, %s48
      %s50 = sphi 0, %s48
      %s51 = sphi 0, %s50
      %s65 = sphi 0, %s51
      %s69 = sphi 0, %s69
      %s71 = sphi 0, %s69
      %s72 = sphi 0, %s71
      %s86 = sphi 0, %s72
      %s90 = sphi 0, %s90
      %s92 = sphi 0, %s90
      %s93 = sphi 0, %s92
      %s107 = sphi 0, %s93
      %s111 = sphi 0, %s111
      %s113 = sphi 0, %s111
      %s114 = sphi 0, %s113
      %s128 = sphi 0, %s114
      %s134 = sphi 0, %s136
      %s137 = sphi 0, %s134
      %s138 = sphi 0, %s137
      %s154 = sphi 0, %s138
    $region4: #{tpu_custom_call.1} parent=1 // loop_header_branch
      %17 = sbr.rel (%p15) target = $region8
    $region5: #{tpu_custom_call.1} parent=1 // loop_body
      %s19 = ssub.s32 %s14, 1
      %s20 = ssub.s32 %s14, 2
      %s21 = sadd.s32 %s14, 1
      %s22 = ssub.s32 %s14, %s21
      %p23 = scmp.eq.s32.totalorder %s22, 0
      %s25 = sadd.s32 %s24, 1
      %s26 = scalar_select %p23, %s24, %s25
      %p29 = pneg %p23
      %p30 = scmp.eq.s32.totalorder %s14, 1
      %p31 = por %p29, %p30
      %p32 = scmp.ne.s32.totalorder %s24, %s27
      %p33 = scmp.eq.s32.totalorder %s14, 0
      %p34 = por %p32, %p33
      %p35 = scmp.ne.s32.totalorder %s24, %s27
      %p36 = scmp.eq.s32.totalorder %s19, 1
      %p37 = por %p35, %p36
      %p38 = scmp.ne.s32.totalorder %s27, %s28
      %p39 = scmp.eq.s32.totalorder %s19, 0
      %p40 = por %p38, %p39
      %p41 = scmp.ne.s32.totalorder %s27, %s28
      %p42 = scmp.eq.s32.totalorder %s20, 1
      %p43 = por %p41, %p42
      %p45 = scmp.ne.s32.totalorder %s28, %s44
      %p46 = scmp.eq.s32.totalorder %s20, 0
      %p47 = por %p45, %p46
      %s49 = sadd.s32 %s48, 1
      %p52 = scmp.eq.s32.totalorder %s14, 1
      %p53 = scmp.ne.s32.totalorder %s48, %s50
      %p54 = scmp.eq.s32.totalorder %s14, 0
      %p55 = por %p53, %p54
      %p56 = scmp.ne.s32.totalorder %s48, %s50
      %p57 = scmp.eq.s32.totalorder %s19, 1
      %p58 = por %p56, %p57
      %p59 = scmp.ne.s32.totalorder %s50, %s51
      %p60 = scmp.eq.s32.totalorder %s19, 0
      %p61 = por %p59, %p60
      %p62 = scmp.ne.s32.totalorder %s50, %s51
      %p63 = scmp.eq.s32.totalorder %s20, 1
      %p64 = por %p62, %p63
      %p66 = scmp.ne.s32.totalorder %s51, %s65
      %p67 = scmp.eq.s32.totalorder %s20, 0
      %p68 = por %p66, %p67
      %s70 = sadd.s32 %s69, 1
      %p73 = scmp.eq.s32.totalorder %s14, 1
      %p74 = scmp.ne.s32.totalorder %s69, %s71
      %p75 = scmp.eq.s32.totalorder %s14, 0
      %p76 = por %p74, %p75
      %p77 = scmp.ne.s32.totalorder %s69, %s71
      %p78 = scmp.eq.s32.totalorder %s19, 1
      %p79 = por %p77, %p78
      %p80 = scmp.ne.s32.totalorder %s71, %s72
      %p81 = scmp.eq.s32.totalorder %s19, 0
      %p82 = por %p80, %p81
      %p83 = scmp.ne.s32.totalorder %s71, %s72
      %p84 = scmp.eq.s32.totalorder %s20, 1
      %p85 = por %p83, %p84
      %p87 = scmp.ne.s32.totalorder %s72, %s86
      %p88 = scmp.eq.s32.totalorder %s20, 0
      %p89 = por %p87, %p88
      %s91 = sadd.s32 %s90, 1
      %p94 = scmp.eq.s32.totalorder %s14, 1
      %p95 = scmp.ne.s32.totalorder %s90, %s92
      %p96 = scmp.eq.s32.totalorder %s14, 0
      %p97 = por %p95, %p96
      %p98 = scmp.ne.s32.totalorder %s90, %s92
      %p99 = scmp.eq.s32.totalorder %s19, 1
      %p100 = por %p98, %p99
      %p101 = scmp.ne.s32.totalorder %s92, %s93
      %p102 = scmp.eq.s32.totalorder %s19, 0
      %p103 = por %p101, %p102
      %p104 = scmp.ne.s32.totalorder %s92, %s93
      %p105 = scmp.eq.s32.totalorder %s20, 1
      %p106 = por %p104, %p105
      %p108 = scmp.ne.s32.totalorder %s93, %s107
      %p109 = scmp.eq.s32.totalorder %s20, 0
      %p110 = por %p108, %p109
      %s112 = sadd.s32 %s111, 1
      %p115 = scmp.eq.s32.totalorder %s14, 1
      %p116 = scmp.ne.s32.totalorder %s111, %s113
      %p117 = scmp.eq.s32.totalorder %s14, 0
      %p118 = por %p116, %p117
      %p119 = scmp.ne.s32.totalorder %s111, %s113
      %p120 = scmp.eq.s32.totalorder %s19, 1
      %p121 = por %p119, %p120
      %p122 = scmp.ne.s32.totalorder %s113, %s114
      %p123 = scmp.eq.s32.totalorder %s19, 0
      %p124 = por %p122, %p123
      %p125 = scmp.ne.s32.totalorder %s113, %s114
      %p126 = scmp.eq.s32.totalorder %s20, 1
      %p127 = por %p125, %p126
      %p129 = scmp.ne.s32.totalorder %s114, %s128
      %p130 = scmp.eq.s32.totalorder %s20, 0
      %p131 = por %p129, %p130
      %s132 = ssub.s32 %s14, %s21
      %p133 = scmp.eq.s32.totalorder %s132, 0
      %s135 = sadd.s32 %s134, 1
      %s136 = scalar_select %p133, %s134, %s135
      %p139 = pneg %p133
      %p140 = scmp.eq.s32.totalorder %s14, 1
      %p141 = por %p139, %p140
      %p142 = scmp.ne.s32.totalorder %s134, %s137
      %p143 = scmp.eq.s32.totalorder %s14, 0
      %p144 = por %p142, %p143
      %p145 = scmp.ne.s32.totalorder %s134, %s137
      %p146 = scmp.eq.s32.totalorder %s19, 1
      %p147 = por %p145, %p146
      %p148 = scmp.ne.s32.totalorder %s137, %s138
      %p149 = scmp.eq.s32.totalorder %s19, 0
      %p150 = por %p148, %p149
      %p151 = scmp.ne.s32.totalorder %s137, %s138
      %p152 = scmp.eq.s32.totalorder %s20, 1
      %p153 = por %p151, %p152
      %p155 = scmp.ne.s32.totalorder %s138, %s154
      %p156 = scmp.eq.s32.totalorder %s20, 0
      %p157 = por %p155, %p156
      %p158 = scmp.le.s32.totalorder 1, %s14
      %p159 = scmp.lt.s32.totalorder %s14, 3
      %p160 = pnand %p158, %p159
      %p161 = pneg %p160
      // Predicated region
      $region9: #{tpu_custom_call.1} parent=5 // pred_check
        _
      $region10: #{tpu_custom_call.1} parent=5 // pred_check_branch
        %163 = sbr.rel (%p160) target = $region12
      $region11: #{tpu_custom_call.1} parent=5 // pred_region
        %s164 = ssub.s32 %s14, 1
        // Predicated region
        $region13: #{tpu_custom_call.1} parent=11 // pred_check
          %p165 = pneg %p61
        $region14: #{tpu_custom_call.1} parent=11 // pred_check_branch
          %167 = sbr.rel (%p165) target = $region16
        $region15: #{tpu_custom_call.1} parent=11 // pred_region
          _
        $region16: #{tpu_custom_call.1} parent=11 // pred_fallthru
          _
        // Predicated region
        $region17: #{tpu_custom_call.1} parent=11 // pred_check
          %p168 = pneg %p82
        $region18: #{tpu_custom_call.1} parent=11 // pred_check_branch
          %170 = sbr.rel (%p168) target = $region20
        $region19: #{tpu_custom_call.1} parent=11 // pred_region
          _
        $region20: #{tpu_custom_call.1} parent=11 // pred_fallthru
          _
        // Predicated region
        $region21: #{tpu_custom_call.1} parent=11 // pred_check
          %p171 = pneg %p103
        $region22: #{tpu_custom_call.1} parent=11 // pred_check_branch
          %173 = sbr.rel (%p171) target = $region24
        $region23: #{tpu_custom_call.1} parent=11 // pred_region
          _
        $region24: #{tpu_custom_call.1} parent=11 // pred_fallthru
          _
        // Predicated region
        $region25: #{tpu_custom_call.1} parent=11 // pred_check
          %p174 = pneg %p124
        $region26: #{tpu_custom_call.1} parent=11 // pred_check_branch
          %176 = sbr.rel (%p174) target = $region28
        $region27: #{tpu_custom_call.1} parent=11 // pred_region
          _
        $region28: #{tpu_custom_call.1} parent=11 // pred_fallthru
          _
      $region12: #{tpu_custom_call.1} parent=5 // pred_fallthru
        _
      %p177 = scmp.lt.s32.totalorder %s14, 2
      // Predicated region
      $region29: #{tpu_custom_call.1} parent=5 // pred_check
        %p178 = pneg %p177
      $region30: #{tpu_custom_call.1} parent=5 // pred_check_branch
        %180 = sbr.rel (%p178) target = $region32
      $region31: #{tpu_custom_call.1} parent=5 // pred_region
        // Predicated region
        $region33: #{tpu_custom_call.1} parent=31 // pred_check
          %p181 = pneg %p34
        $region34: #{tpu_custom_call.1} parent=31 // pred_check_branch
          %183 = sbr.rel (%p181) target = $region36
        $region35: #{tpu_custom_call.1} parent=31 // pred_region
          %s184 = smul.u32 16, %s14
          %p185 = scmp.lt.s32.totalorder %s184, 31
          %s186 = scalar_select %p185, %s184, 31
          %s187 = smul.addr %s186, 8
          %s188 = scalar_lea.vmem %s0, %s187
          %s189 = smul.u32 16, %s14
        $region36: #{tpu_custom_call.1} parent=31 // pred_fallthru
          _
      $region32: #{tpu_custom_call.1} parent=5 // pred_fallthru
        _
      %p190 = scmp.le.s32.totalorder 1, %s14
      %p191 = scmp.lt.s32.totalorder %s14, 3
      %p192 = pnand %p190, %p191
      %p193 = pneg %p192
      // Predicated region
      $region37: #{tpu_custom_call.1} parent=5 // pred_check
        _
      $region38: #{tpu_custom_call.1} parent=5 // pred_check_branch
        %195 = sbr.rel (%p192) target = $region40
      $region39: #{tpu_custom_call.1} parent=5 // pred_region
        %s196 = ssub.s32 %s14, 1
        %s197 = smul.u32 16, %s19
        %p198 = scmp.lt.s32.totalorder %s197, 31
        %s199 = scalar_select %p198, %s197, 31
        %s200 = smul.addr %s199, 8
        %s201 = scalar_lea.vmem %s0, %s200
        %p202 = pneg %p40
        %p203 = pneg %p37
        %p204 = pneg %p61
        %p205 = pneg %p58
        %p206 = pneg %p82
        %p207 = pneg %p79
        %p208 = pneg %p103
        %p209 = pneg %p100
        %p210 = pneg %p124
        %p211 = pneg %p121
        %p212 = pneg %p150
        %p213 = pneg %p147
        %s214 = sand.u32 %s137, 1
        %s215 = scalar_lea.sflag [#allocation3], %s214
        %s216 = sand.u32 %s137, 1
        %s217 = smul.addr %s216, 64
        %s218 = scalar_lea.vmem [#allocation2], %s217
        %s219 = smul.u32 16, %s19
        %p220 = scmp.lt.s32.totalorder %s219, 31
        %s221 = scalar_select %p220, %s219, 31
        %s222 = smul.addr %s221, 8
        %s223 = scalar_lea.vmem %s0, %s222
        %s224 = smul.u32 16, %s19
        %s225 = smul.u32 16, %s19
        %v227 = vld [vmem:[%s223] sm:$0xff]
        %v228 = vld [vmem:[%s223 + $0x8] sm:$0xff]
        %v229 = vld [vmem:[%s223 + $0x10] sm:$0xff]
        %v230 = vld [vmem:[%s223 + $0x18] sm:$0xff]
        %v231 = vld [vmem:[%s223 + $0x20] sm:$0xff]
        %v232 = vld [vmem:[%s223 + $0x28] sm:$0xff]
        %v233 = vld [vmem:[%s223 + $0x30] sm:$0xff]
        %v234 = vld [vmem:[%s223 + $0x38] sm:$0xff]
        %v235 = vld [vmem:[%s223 + $0x40] sm:$0xff]
        %v236 = vld [vmem:[%s223 + $0x48] sm:$0xff]
        %v237 = vld [vmem:[%s223 + $0x50] sm:$0xff]
        %v238 = vld [vmem:[%s223 + $0x58] sm:$0xff]
        %v239 = vld [vmem:[%s223 + $0x60] sm:$0xff]
        %v240 = vld [vmem:[%s223 + $0x68] sm:$0xff]
        %v241 = vld [vmem:[%s223 + $0x70] sm:$0xff]
        %v242 = vld [vmem:[%s223 + $0x78] sm:$0xff]
        %v243 = vpack.c.bf16 %v228, %v227
        %v244 = vpack.c.bf16 %v230, %v229
        %v245 = vpack.c.bf16 %v232, %v231
        %v246 = vpack.c.bf16 %v234, %v233
        %v247 = vpack.c.bf16 %v236, %v235
        %v248 = vpack.c.bf16 %v238, %v237
        %v249 = vpack.c.bf16 %v240, %v239
        %v250 = vpack.c.bf16 %v242, %v241
        %v251 = vld [vmem:[%s1] sm:$0xf]
        %v252 = vld [vmem:[%s1 + $0x4] sm:$0xf]
        %v253 = vld [vmem:[%s1 + $0x8] sm:$0xf]
        %v254 = vld [vmem:[%s1 + $0xc] sm:$0xf]
        %v255 = vld [vmem:[%s1 + $0x10] sm:$0xf]
        %v256 = vld [vmem:[%s1 + $0x14] sm:$0xf]
        %v257 = vld [vmem:[%s2] sm:$0x1]
        %v259 = vlaneseq
        %v260 = vshrl.u32 %v259, 7
        %v261 = vsub.s32 0, %v260
        %v262 = vrot.slane %v257, %v261
        %v270 = vunpack.c.l.b16 %v251
        %v271 = vunpack.c.l.b16 %v252
        %v272 = vunpack.c.l.b16 %v253
        %v273 = vunpack.c.l.b16 %v254
        %v274 = vunpack.c.l.b16 %v255
        %v275 = vunpack.c.l.b16 %v256
        %v276 = vpack.c.b16 %v271, %v270
        %v277 = vpack.c.b16 %v273, %v272
        %v278 = vpack.c.b16 %v275, %v274
        %vm282 = vcmask 392192
        %v284 = vsel %vm282, %v243, 0
        %v287 = vsel %vm282, %v244, 0
        %v290 = vsel %vm282, %v245, 0
        %v293 = vsel %vm282, %v246, 0
        %v296 = vsel %vm282, %v247, 0
        %v299 = vsel %vm282, %v248, 0
        %v302 = vsel %vm282, %v249, 0
        %v305 = vsel %vm282, %v250, 0
        %307 = vmatprep.subr.bf16.mxu0 0
        %308 = vmatpush1.bf16.msra.mxu0 %v276
        %309 = vmatprep.subr.bf16.mxu0 0
        %310 = vmatpush1.bf16.msra.mxu0 %v277
        %311 = vmatprep.subr.bf16.mxu0 0
        %312 = vmatpush1.bf16.msra.mxu0 %v278
        %313 = vmatprep.subr.bf16.mxu0 0
        %314 = vmatpush1.bf16.msra.mxu0 0
        %315 = vmatprep.subr.bf16.mxu0 0
        %316 = vmatpush1.bf16.msra.mxu0 0
        %317 = vmatprep.subr.bf16.mxu0 0
        %318 = vmatpush1.bf16.msra.mxu0 0
        %319 = vmatprep.subr.bf16.mxu0 0
        %320 = vmatpush1.bf16.msra.mxu0 0
        %321 = vmatprep.subr.bf16.mxu0 0
        %322 = vmatpush1.bf16.msra.mxu0 0
        %323 = vmatprep.subr.bf16.mxu0 0
        %324 = vmatpush1.bf16.msra.mxu0 0
        %325 = vmatprep.subr.bf16.mxu0 0
        %326 = vmatpush1.bf16.msra.mxu0 0
        %327 = vmatprep.subr.bf16.mxu0 0
        %328 = vmatpush1.bf16.msra.mxu0 0
        %329 = vmatprep.subr.bf16.mxu0 0
        %330 = vmatpush1.bf16.msra.mxu0 0
        %331 = vmatprep.subr.bf16.mxu0 0
        %332 = vmatpush1.bf16.msra.mxu0 0
        %333 = vmatprep.subr.bf16.mxu0 0
        %334 = vmatpush1.bf16.msra.mxu0 0
        %335 = vmatprep.subr.bf16.mxu0 0
        %336 = vmatpush1.bf16.msra.mxu0 0
        %337 = vmatprep.subr.bf16.mxu0 0
        %338 = vmatpush1.bf16.msra.mxu0 0
        %339 = vmatprep.mubr.bf16.mxu0 0
        %340 = vmatmul.mubr.bf16.gmra.mrb[0].mxu0 %v284
        %v341 = vpop.f32.mrb[0].mxu0
        %v342 = vadd.f32 %v262, %v341
        %v343 = vpop.f32.mrb[0].mxu0
        %v344 = vpop.f32.mrb[0].mxu0
        %v345 = vadd.f32 %v262, %v344
        %v346 = vpop.f32.mrb[0].mxu0
        %347 = vmatprep.mubr.bf16.mxu0 0
        %348 = vmatmul.mubr.bf16.gmra.mrb[0].mxu0 %v287
        %v349 = vpop.f32.mrb[0].mxu0
        %v350 = vadd.f32 %v262, %v349
        %v351 = vpop.f32.mrb[0].mxu0
        %v352 = vpop.f32.mrb[0].mxu0
        %v353 = vadd.f32 %v262, %v352
        %v354 = vpop.f32.mrb[0].mxu0
        %355 = vmatprep.mubr.bf16.mxu0 0
        %356 = vmatmul.mubr.bf16.gmra.mrb[0].mxu0 %v290
        %v357 = vpop.f32.mrb[0].mxu0
        %v358 = vadd.f32 %v262, %v357
        %v359 = vpop.f32.mrb[0].mxu0
        %v360 = vpop.f32.mrb[0].mxu0
        %v361 = vadd.f32 %v262, %v360
        %v362 = vpop.f32.mrb[0].mxu0
        %363 = vmatprep.mubr.bf16.mxu0 0
        %364 = vmatmul.mubr.bf16.gmra.mrb[0].mxu0 %v293
        %v365 = vpop.f32.mrb[0].mxu0
        %v366 = vadd.f32 %v262, %v365
        %v367 = vpop.f32.mrb[0].mxu0
        %v368 = vpop.f32.mrb[0].mxu0
        %v369 = vadd.f32 %v262, %v368
        %v370 = vpop.f32.mrb[0].mxu0
        %371 = vmatprep.mubr.bf16.mxu0 0
        %372 = vmatmul.mubr.bf16.gmra.mrb[0].mxu0 %v296
        %v373 = vpop.f32.mrb[0].mxu0
        %v374 = vadd.f32 %v262, %v373
        %v375 = vpop.f32.mrb[0].mxu0
        %v376 = vpop.f32.mrb[0].mxu0
        %v377 = vadd.f32 %v262, %v376
        %v378 = vpop.f32.mrb[0].mxu0
        %379 = vmatprep.mubr.bf16.mxu0 0
        %380 = vmatmul.mubr.bf16.gmra.mrb[0].mxu0 %v299
        %v381 = vpop.f32.mrb[0].mxu0
        %v382 = vadd.f32 %v262, %v381
        %v383 = vpop.f32.mrb[0].mxu0
        %v384 = vpop.f32.mrb[0].mxu0
        %v385 = vadd.f32 %v262, %v384
        %v386 = vpop.f32.mrb[0].mxu0
        %387 = vmatprep.mubr.bf16.mxu0 0
        %388 = vmatmul.mubr.bf16.gmra.mrb[0].mxu0 %v302
        %v389 = vpop.f32.mrb[0].mxu0
        %v390 = vadd.f32 %v262, %v389
        %v391 = vpop.f32.mrb[0].mxu0
        %v392 = vpop.f32.mrb[0].mxu0
        %v393 = vadd.f32 %v262, %v392
        %v394 = vpop.f32.mrb[0].mxu0
        %395 = vmatprep.mubr.bf16.mxu0 0
        %396 = vmatmul.mubr.bf16.gmra.mrb[0].mxu0 %v305
        %v397 = vpop.f32.mrb[0].mxu0
        %v398 = vadd.f32 %v262, %v397
        %v399 = vpop.f32.mrb[0].mxu0
        %v400 = vpop.f32.mrb[0].mxu0
        %v401 = vadd.f32 %v262, %v400
        %v402 = vpop.f32.mrb[0].mxu0
        %403 = vdwg.mxu0
        %v404 = vmax.f32 %v342, 0.0
        %v405 = vmax.f32 %v345, 0.0
        %v406 = vmax.f32 %v350, 0.0
        %v407 = vmax.f32 %v353, 0.0
        %v408 = vmax.f32 %v358, 0.0
        %v409 = vmax.f32 %v361, 0.0
        %v410 = vmax.f32 %v366, 0.0
        %v411 = vmax.f32 %v369, 0.0
        %v412 = vmax.f32 %v374, 0.0
        %v413 = vmax.f32 %v377, 0.0
        %v414 = vmax.f32 %v382, 0.0
        %v415 = vmax.f32 %v385, 0.0
        %v416 = vmax.f32 %v390, 0.0
        %v417 = vmax.f32 %v393, 0.0
        %v418 = vmax.f32 %v398, 0.0
        %v419 = vmax.f32 %v401, 0.0
        %v420 = vpack.c.bf16 %v405, %v404
        %v421 = vpack.c.bf16 %v407, %v406
        %v422 = vpack.c.bf16 %v409, %v408
        %v423 = vpack.c.bf16 %v411, %v410
        %v424 = vpack.c.bf16 %v413, %v412
        %v425 = vpack.c.bf16 %v415, %v414
        %v426 = vpack.c.bf16 %v417, %v416
        %v427 = vpack.c.bf16 %v419, %v418
        %v428 = vld [vmem:[%s3] sm:$0xf]
        %v429 = vld [vmem:[%s3 + $0x4] sm:$0xf]
        %v430 = vld [vmem:[%s3 + $0x8] sm:$0xf]
        %v431 = vld [vmem:[%s3 + $0xc] sm:$0xf]
        %v432 = vld [vmem:[%s3 + $0x10] sm:$0xf]
        %v433 = vld [vmem:[%s3 + $0x14] sm:$0xf]
        %v434 = vld [vmem:[%s3 + $0x18] sm:$0xf]
        %v435 = vld [vmem:[%s3 + $0x1c] sm:$0xf]
        %v436 = vld [vmem:[%s3 + $0x20] sm:$0xf]
        %v437 = vld [vmem:[%s3 + $0x24] sm:$0xf]
        %v438 = vld [vmem:[%s3 + $0x28] sm:$0xf]
        %v439 = vld [vmem:[%s3 + $0x2c] sm:$0xf]
        %v440 = vld [vmem:[%s3 + $0x30] sm:$0xf]
        %v441 = vld [vmem:[%s3 + $0x34] sm:$0xf]
        %v442 = vld [vmem:[%s3 + $0x38] sm:$0xf]
        %v443 = vld [vmem:[%s3 + $0x3c] sm:$0xf]
        %v444 = vld [vmem:[%s4] sm:$0x1]
        %v446 = vlaneseq
        %v447 = vshrl.u32 %v446, 7
        %v448 = vsub.s32 0, %v447
        %v449 = vrot.slane %v444, %v448
        %v467 = vunpack.c.l.b16 %v428
        %v468 = vunpack.c.l.b16 %v429
        %v469 = vunpack.c.l.b16 %v430
        %v470 = vunpack.c.l.b16 %v431
        %v471 = vunpack.c.l.b16 %v432
        %v472 = vunpack.c.l.b16 %v433
        %v473 = vunpack.c.l.b16 %v434
        %v474 = vunpack.c.l.b16 %v435
        %v475 = vunpack.c.l.b16 %v436
        %v476 = vunpack.c.l.b16 %v437
        %v477 = vunpack.c.l.b16 %v438
        %v478 = vunpack.c.l.b16 %v439
        %v479 = vunpack.c.l.b16 %v440
        %v480 = vunpack.c.l.b16 %v441
        %v481 = vunpack.c.l.b16 %v442
        %v482 = vunpack.c.l.b16 %v443
        %v483 = vpack.c.b16 %v468, %v467
        %v484 = vpack.c.b16 %v470, %v469
        %v485 = vpack.c.b16 %v472, %v471
        %v486 = vpack.c.b16 %v474, %v473
        %v487 = vpack.c.b16 %v476, %v475
        %v488 = vpack.c.b16 %v478, %v477
        %v489 = vpack.c.b16 %v480, %v479
        %v490 = vpack.c.b16 %v482, %v481
        %499 = vmatprep.subr.bf16.mxu0 0
        %500 = vmatpush1.bf16.msra.mxu0 %v483
        %501 = vmatprep.subr.bf16.mxu0 0
        %502 = vmatpush1.bf16.msra.mxu0 %v484
        %503 = vmatprep.subr.bf16.mxu0 0
        %504 = vmatpush1.bf16.msra.mxu0 %v485
        %505 = vmatprep.subr.bf16.mxu0 0
        %506 = vmatpush1.bf16.msra.mxu0 %v486
        %507 = vmatprep.subr.bf16.mxu0 0
        %508 = vmatpush1.bf16.msra.mxu0 %v487
        %509 = vmatprep.subr.bf16.mxu0 0
        %510 = vmatpush1.bf16.msra.mxu0 %v488
        %511 = vmatprep.subr.bf16.mxu0 0
        %512 = vmatpush1.bf16.msra.mxu0 %v489
        %513 = vmatprep.subr.bf16.mxu0 0
        %514 = vmatpush1.bf16.msra.mxu0 %v490
        %515 = vmatprep.subr.bf16.mxu0 0
        %516 = vmatpush1.bf16.msra.mxu0 0
        %517 = vmatprep.subr.bf16.mxu0 0
        %518 = vmatpush1.bf16.msra.mxu0 0
        %519 = vmatprep.subr.bf16.mxu0 0
        %520 = vmatpush1.bf16.msra.mxu0 0
        %521 = vmatprep.subr.bf16.mxu0 0
        %522 = vmatpush1.bf16.msra.mxu0 0
        %523 = vmatprep.subr.bf16.mxu0 0
        %524 = vmatpush1.bf16.msra.mxu0 0
        %525 = vmatprep.subr.bf16.mxu0 0
        %526 = vmatpush1.bf16.msra.mxu0 0
        %527 = vmatprep.subr.bf16.mxu0 0
        %528 = vmatpush1.bf16.msra.mxu0 0
        %529 = vmatprep.subr.bf16.mxu0 0
        %530 = vmatpush1.bf16.msra.mxu0 0
        %531 = vmatprep.mubr.bf16.mxu0 0
        %532 = vmatmul.mubr.bf16.gmra.mrb[0].mxu0 %v420
        %v533 = vpop.f32.mrb[0].mxu0
        %v534 = vadd.f32 %v449, %v533
        %v535 = vpop.f32.mrb[0].mxu0
        %v536 = vpop.f32.mrb[0].mxu0
        %v537 = vadd.f32 %v449, %v536
        %v538 = vpop.f32.mrb[0].mxu0
        %539 = vmatprep.mubr.bf16.mxu0 0
        %540 = vmatmul.mubr.bf16.gmra.mrb[0].mxu0 %v421
        %v541 = vpop.f32.mrb[0].mxu0
        %v542 = vadd.f32 %v449, %v541
        %v543 = vpop.f32.mrb[0].mxu0
        %v544 = vpop.f32.mrb[0].mxu0
        %v545 = vadd.f32 %v449, %v544
        %v546 = vpop.f32.mrb[0].mxu0
        %547 = vmatprep.mubr.bf16.mxu0 0
        %548 = vmatmul.mubr.bf16.gmra.mrb[0].mxu0 %v422
        %v549 = vpop.f32.mrb[0].mxu0
        %v550 = vadd.f32 %v449, %v549
        %v551 = vpop.f32.mrb[0].mxu0
        %v552 = vpop.f32.mrb[0].mxu0
        %v553 = vadd.f32 %v449, %v552
        %v554 = vpop.f32.mrb[0].mxu0
        %555 = vmatprep.mubr.bf16.mxu0 0
        %556 = vmatmul.mubr.bf16.gmra.mrb[0].mxu0 %v423
        %v557 = vpop.f32.mrb[0].mxu0
        %v558 = vadd.f32 %v449, %v557
        %v559 = vpop.f32.mrb[0].mxu0
        %v560 = vpop.f32.mrb[0].mxu0
        %v561 = vadd.f32 %v449, %v560
        %v562 = vpop.f32.mrb[0].mxu0
        %563 = vmatprep.mubr.bf16.mxu0 0
        %564 = vmatmul.mubr.bf16.gmra.mrb[0].mxu0 %v424
        %v565 = vpop.f32.mrb[0].mxu0
        %v566 = vadd.f32 %v449, %v565
        %v567 = vpop.f32.mrb[0].mxu0
        %v568 = vpop.f32.mrb[0].mxu0
        %v569 = vadd.f32 %v449, %v568
        %v570 = vpop.f32.mrb[0].mxu0
        %571 = vmatprep.mubr.bf16.mxu0 0
        %572 = vmatmul.mubr.bf16.gmra.mrb[0].mxu0 %v425
        %v573 = vpop.f32.mrb[0].mxu0
        %v574 = vadd.f32 %v449, %v573
        %v575 = vpop.f32.mrb[0].mxu0
        %v576 = vpop.f32.mrb[0].mxu0
        %v577 = vadd.f32 %v449, %v576
        %v578 = vpop.f32.mrb[0].mxu0
        %579 = vmatprep.mubr.bf16.mxu0 0
        %580 = vmatmul.mubr.bf16.gmra.mrb[0].mxu0 %v426
        %v581 = vpop.f32.mrb[0].mxu0
        %v582 = vadd.f32 %v449, %v581
        %v583 = vpop.f32.mrb[0].mxu0
        %v584 = vpop.f32.mrb[0].mxu0
        %v585 = vadd.f32 %v449, %v584
        %v586 = vpop.f32.mrb[0].mxu0
        %587 = vmatprep.mubr.bf16.mxu0 0
        %588 = vmatmul.mubr.bf16.gmra.mrb[0].mxu0 %v427
        %v589 = vpop.f32.mrb[0].mxu0
        %v590 = vadd.f32 %v449, %v589
        %v591 = vpop.f32.mrb[0].mxu0
        %v592 = vpop.f32.mrb[0].mxu0
        %v593 = vadd.f32 %v449, %v592
        %v594 = vpop.f32.mrb[0].mxu0
        %595 = vdwg.mxu0
        %v596 = vpack.c.bf16 %v537, %v534
        %v597 = vpack.c.bf16 %v545, %v542
        %v598 = vpack.c.bf16 %v553, %v550
        %v599 = vpack.c.bf16 %v561, %v558
        %v600 = vpack.c.bf16 %v569, %v566
        %v601 = vpack.c.bf16 %v577, %v574
        %v602 = vpack.c.bf16 %v585, %v582
        %v603 = vpack.c.bf16 %v593, %v590
        %v612 = vunpack.c.l.b16 %v596
        %v613 = vunpack.c.h.b16 %v596
        %v614 = vunpack.c.l.b16 %v597
        %v615 = vunpack.c.h.b16 %v597
        %v616 = vunpack.c.l.b16 %v598
        %v617 = vunpack.c.h.b16 %v598
        %v618 = vunpack.c.l.b16 %v599
        %v619 = vunpack.c.h.b16 %v599
        %v620 = vunpack.c.l.b16 %v600
        %v621 = vunpack.c.h.b16 %v600
        %v622 = vunpack.c.l.b16 %v601
        %v623 = vunpack.c.h.b16 %v601
        %v624 = vunpack.c.l.b16 %v602
        %v625 = vunpack.c.h.b16 %v602
        %v626 = vunpack.c.l.b16 %v603
        %v627 = vunpack.c.h.b16 %v603
        %v628 = vpack.c.b16 %v612, %v612
        %v629 = vpack.c.b16 %v613, %v613
        %v630 = vpack.c.b16 %v614, %v614
        %v631 = vpack.c.b16 %v615, %v615
        %v632 = vpack.c.b16 %v616, %v616
        %v633 = vpack.c.b16 %v617, %v617
        %v634 = vpack.c.b16 %v618, %v618
        %v635 = vpack.c.b16 %v619, %v619
        %v636 = vpack.c.b16 %v620, %v620
        %v637 = vpack.c.b16 %v621, %v621
        %v638 = vpack.c.b16 %v622, %v622
        %v639 = vpack.c.b16 %v623, %v623
        %v640 = vpack.c.b16 %v624, %v624
        %v641 = vpack.c.b16 %v625, %v625
        %v642 = vpack.c.b16 %v626, %v626
        %v643 = vpack.c.b16 %v627, %v627
        %660 = vst [vmem:[%s218] sm:$0xf] %v628
        %661 = vst [vmem:[%s218 + $0x4] sm:$0xf] %v629
        %662 = vst [vmem:[%s218 + $0x8] sm:$0xf] %v630
        %663 = vst [vmem:[%s218 + $0xc] sm:$0xf] %v631
        %664 = vst [vmem:[%s218 + $0x10] sm:$0xf] %v632
        %665 = vst [vmem:[%s218 + $0x14] sm:$0xf] %v633
        %666 = vst [vmem:[%s218 + $0x18] sm:$0xf] %v634
        %667 = vst [vmem:[%s218 + $0x1c] sm:$0xf] %v635
        %668 = vst [vmem:[%s218 + $0x20] sm:$0xf] %v636
        %669 = vst [vmem:[%s218 + $0x24] sm:$0xf] %v637
        %670 = vst [vmem:[%s218 + $0x28] sm:$0xf] %v638
        %671 = vst [vmem:[%s218 + $0x2c] sm:$0xf] %v639
        %672 = vst [vmem:[%s218 + $0x30] sm:$0xf] %v640
        %673 = vst [vmem:[%s218 + $0x34] sm:$0xf] %v641
        %674 = vst [vmem:[%s218 + $0x38] sm:$0xf] %v642
        %675 = vst [vmem:[%s218 + $0x3c] sm:$0xf] %v643
        %s676 = sand.u32 %s137, 1
        %s677 = scalar_lea.sflag [#allocation3], %s676
        %s678 = sand.u32 %s137, 1
        %s679 = smul.addr %s678, 64
        %s680 = scalar_lea.vmem [#allocation2], %s679
        // Predicated region
        $region41: #{tpu_custom_call.1} parent=39 // pred_check
          %p681 = pneg %p147
        $region42: #{tpu_custom_call.1} parent=39 // pred_check_branch
          %683 = sbr.rel (%p681) target = $region44
        $region43: #{tpu_custom_call.1} parent=39 // pred_region
          %s684 = smul.u32 16, %s19
          %s686 = ssub.s32 1024, 1024
          %687 = vsyncadd %s677, %s686
          %s688 = smul.addr %s684, 64
          %s689 = scalar_lea.hbm %s5, %s688
          %s690 = sshll.u32 %s680, 4
          %s691 = int_to_ptr.vmem [resolvable:$true] %s690
          %696 = dma.vmem_to_hbm [thread:$0]  %s691, 1024, %s689, %s677, 64, 64, 4
        $region44: #{tpu_custom_call.1} parent=39 // pred_fallthru
          _
      $region40: #{tpu_custom_call.1} parent=5 // pred_fallthru
        _
      %p697 = scmp.le.s32.totalorder 2, %s14
      // Predicated region
      $region45: #{tpu_custom_call.1} parent=5 // pred_check
        %p698 = pneg %p697
      $region46: #{tpu_custom_call.1} parent=5 // pred_check_branch
        %700 = sbr.rel (%p698) target = $region48
      $region47: #{tpu_custom_call.1} parent=5 // pred_region
        %s701 = ssub.s32 %s14, 2
        // Predicated region
        $region49: #{tpu_custom_call.1} parent=47 // pred_check
          %p702 = pneg %p153
        $region50: #{tpu_custom_call.1} parent=47 // pred_check_branch
          %704 = sbr.rel (%p702) target = $region52
        $region51: #{tpu_custom_call.1} parent=47 // pred_region
          %s705 = sand.u32 %s138, 1
          %s706 = scalar_lea.sflag [#allocation3], %s705
          %s707 = sand.u32 %s138, 1
          %s708 = smul.addr %s707, 64
          %s709 = scalar_lea.vmem [#allocation2], %s708
          %710 = dma.done %s706, 1024
        $region52: #{tpu_custom_call.1} parent=47 // pred_fallthru
          _
      $region48: #{tpu_custom_call.1} parent=5 // pred_fallthru
        _
    $region6: #{tpu_custom_call.1} parent=1 // loop_footer
      %s18 = sadd.s32 1, %s14
    $region7: #{tpu_custom_call.1} parent=1 // loop_footer_branch
      %13 = sbr.rel target = $region3
    $region8: #{tpu_custom_call.1} parent=1 // loop_exit
      _
    %711 = vsyncpa [#allocation3], 1
    %s712 = scalar_lea.sflag [#allocation3], 1
    %713 = vsyncpa %s712, 1

</llo_original>
